<compile_context>
chip_gen: v6e
topology: v6e:2x2x1
jax: 0.10.0
libtpu: 0.0.40
codegen_flags: <defaults>
</compile_context>

<pallas_src>
import functools
import math

import jax
import jax.numpy as jnp
from jax import lax
from jax.experimental import pallas as pl
from jax.experimental.pallas import tpu as pltpu


def encoder_layer_kernel(
    x_ref, npm_ref, amask_ref,
    wq_ref, bq_ref, wk_ref, bk_ref,
    wo_ref, bo_ref, g1_ref, be1_ref,
    w1_ref, b1_ref, w2_ref, b2_ref, g2_ref, be2_ref,
    out_ref, attn_ref,
    *, n_heads):
    eps = 1e-5
    neg_big = -1e30  # finite "masked" value: fully-masked rows stay finite (no NaN)

    Bt, L, D = x_ref.shape
    BL = Bt * L

    x3_f32 = x_ref[...].astype(jnp.float32)            # [Bt, L, D]
    x2_f32 = x3_f32.reshape(BL, D)                      # token-flattened for matmuls
    x2_bf = x2_f32.astype(jnp.bfloat16)                 # MXU operand

    npm2 = npm_ref[...].astype(jnp.float32).reshape(BL, 1)   # non_pad_mask
    mask_b = amask_ref[...] > 0                          # [Bt, L, L], hoisted once

    # fc(concat_heads) + bias + residual, accumulated per head (no lane-axis concat)
    o = x2_f32 + bo_ref[...]                             # [BL, D] f32

    for h in range(n_heads):                             # static unroll: n_heads is small
        # per-head projections; /8.0 scale is pre-folded into wq/bq in the wrapper
        q2 = jnp.dot(x2_bf, wq_ref[h], preferred_element_type=jnp.float32) + bq_ref[h]
        k2 = jnp.dot(x2_bf, wk_ref[h], preferred_element_type=jnp.float32) + bk_ref[h]
        q3 = q2.reshape(Bt, L, q2.shape[-1]).astype(jnp.bfloat16)
        k3 = k2.reshape(Bt, L, k2.shape[-1]).astype(jnp.bfloat16)  # V == K (reference bug)

        # batched Q.K^T, contracting last dims -> no transpose/relayout
        scores = jnp.einsum("bqd,bkd->bqk", q3, k3,
                            preferred_element_type=jnp.float32)     # [Bt, L, L]
        scores = jnp.where(mask_b, neg_big, scores)
        m = jnp.max(scores, axis=-1, keepdims=True)
        e = jnp.exp(scores - m)
        denom = jnp.sum(e, axis=-1, keepdims=True)
        attn = e * (1.0 / denom)                          # exact: stored rows sum to ~1
        attn_ref[h] = attn.astype(attn_ref.dtype)         # per-head, head-major store

        ctx = jnp.einsum("bqk,bkd->bqd", attn.astype(jnp.bfloat16), k3,
                         preferred_element_type=jnp.float32)         # [Bt, L, dv]
        ctx2 = ctx.reshape(BL, ctx.shape[-1]).astype(jnp.bfloat16)
        o = o + jnp.dot(ctx2, wo_ref[h], preferred_element_type=jnp.float32)

    # --- LayerNorm 1 (residual already included) + non_pad_mask ---
    mu = jnp.mean(o, axis=-1, keepdims=True)
    var = jnp.mean((o - mu) ** 2, axis=-1, keepdims=True)
    o = (o - mu) * lax.rsqrt(var + eps) * g1_ref[...] + be1_ref[...]
    o = o * npm2                                          # enc_output *= non_pad_mask

    # --- position-wise feed-forward (Conv1d k=1 == linear), residual + LayerNorm 2 ---
    h1 = jnp.maximum(
        jnp.dot(o.astype(jnp.bfloat16), w1_ref[...],
                preferred_element_type=jnp.float32) + b1_ref[...], 0.0)
    h2 = jnp.dot(h1.astype(jnp.bfloat16), w2_ref[...],
                 preferred_element_type=jnp.float32) + b2_ref[...]
    o2 = h2 + o
    mu2 = jnp.mean(o2, axis=-1, keepdims=True)
    var2 = jnp.mean((o2 - mu2) ** 2, axis=-1, keepdims=True)
    o2 = (o2 - mu2) * lax.rsqrt(var2 + eps) * g2_ref[...] + be2_ref[...]
    o2 = o2 * npm2                                        # enc_output *= non_pad_mask

    out_ref[...] = o2.reshape(Bt, L, D).astype(out_ref.dtype)


def _const_index(ndim):
    return lambda b: (0,) * ndim


def _nbytes(a):
    return int(a.size) * a.dtype.itemsize


def encoder_layer(x, non_pad_mask, self_attn_mask, params, *, n_heads, dk, dv,
                  batch_block=None, attn_dtype=jnp.float32):
    B, L, D = x.shape
    bf16 = jnp.bfloat16
    scale = 0.125  # literal /8.0 from the reference, folded into wq/bq

    if batch_block is None:
        batch_block = math.gcd(B, 8)  # feed the MXU with M = Bt*L tokens per step
    assert B % batch_block == 0
    Bt = batch_block

    # --- one-time weight prep (constant-folds under jit): per-head leading axis,
    #     [in, out] orientation, bf16 MXU operands, scale folded into Q path. ---
    wq_h = ((params["wq"] * scale).T.reshape(D, n_heads, dk)
            .transpose(1, 0, 2).astype(bf16))             # [H, D, dk]
    bq_h = (params["bq"] * scale).reshape(n_heads, 1, dk)  # [H, 1, dk]
    wk_h = (params["wk"].T.reshape(D, n_heads, dk)
            .transpose(1, 0, 2).astype(bf16))              # [H, D, dk]
    bk_h = params["bk"].reshape(n_heads, 1, dk)            # [H, 1, dk]
    wo_h = params["wo"].T.reshape(n_heads, dv, D).astype(bf16)   # [H, dv, D]
    w1_t = params["w1"].T.astype(bf16)                     # [D, d_inner]
    w2_t = params["w2"].T.astype(bf16)                     # [d_inner, D]
    d_inner = params["w1"].shape[0]

    param_list = [
        wq_h, bq_h, wk_h, bk_h,
        wo_h, params["bo"], params["g1"], params["be1"],
        w1_t, params["b1"], w2_t, params["b2"],
        params["g2"], params["be2"],
    ]

    in_specs = [
        pl.BlockSpec((Bt, L, D), lambda b: (b, 0, 0)),   # x
        pl.BlockSpec((Bt, L, 1), lambda b: (b, 0, 0)),   # non_pad_mask
        pl.BlockSpec((Bt, L, L), lambda b: (b, 0, 0)),   # self_attn_mask
    ] + [
        # constant index_map across the grid -> single-buffered (halves weight VMEM)
        pl.BlockSpec(p.shape, _const_index(p.ndim), pipeline_mode=pl.Buffered(1))
        for p in param_list
    ]

    out_shape = (
        jax.ShapeDtypeStruct((B, L, D), jnp.float32),                 # enc_output
        jax.ShapeDtypeStruct((n_heads, B, L, L), attn_dtype),         # attn (head-major)
    )
    out_specs = (
        pl.BlockSpec((Bt, L, D), lambda b: (b, 0, 0)),
        pl.BlockSpec((n_heads, Bt, L, L), lambda b: (0, b, 0, 0)),
    )

    # --- explicit VMEM budget: single-buffered weights + double-buffered I/O blocks
    #     + rough allowance for in-kernel intermediates. ---
    attn_isz = jnp.dtype(attn_dtype).itemsize
    weight_bytes = sum(_nbytes(p) for p in param_list)
    io_bytes = 2 * (4 * (Bt * L * D + Bt * L + Bt * L * L)            # inputs
                    + 4 * Bt * L * D + attn_isz * n_heads * Bt * L * L)  # outputs
    interm_bytes = 4 * Bt * L * (4 * dk + 4 * L + 6 * D + 2 * d_inner)
    vmem_limit = int(min(64 * 1024 * 1024,
                         max(32 * 1024 * 1024,
                             2 * (weight_bytes + io_bytes + interm_bytes))))

    kernel = functools.partial(encoder_layer_kernel, n_heads=n_heads)

    enc_out, attn = pl.pallas_call(
        kernel,
        out_shape=out_shape,
        grid=(B // Bt,),
        in_specs=in_specs,
        out_specs=out_specs,
        compiler_params=pltpu.CompilerParams(
            dimension_semantics=("parallel",),      # batch blocks are independent
            vmem_limit_bytes=vmem_limit),
    )(x, non_pad_mask, self_attn_mask, *param_list)

    # Already head-major: PyTorch layout [n_heads * B, L, L] is just a free reshape.
    attn = attn.reshape(n_heads * B, L, L)
    return enc_out, attn


def init_params(key, d_model, n_heads, dk, dv, d_inner):
    ks = jax.random.split(key, 8)
    f32 = jnp.float32
    wq = (jax.random.normal(ks[0], (n_heads * dk, d_model), f32)
          * jnp.sqrt(2.0 / (d_model + dk)))
    bq = jnp.zeros((1, n_heads * dk), f32)
    wk = (jax.random.normal(ks[1], (n_heads * dk, d_model), f32)
          * jnp.sqrt(2.0 / (d_model + dk)))
    bk = jnp.zeros((1, n_heads * dk), f32)
    wo = (jax.random.normal(ks[2], (d_model, n_heads * dv), f32)
          * jnp.sqrt(2.0 / (d_model + n_heads * dv)))       # xavier-ish
    bo = jnp.zeros((1, d_model), f32)
    w1 = jax.random.normal(ks[3], (d_inner, d_model), f32) * 0.05
    b1 = jax.random.normal(ks[4], (1, d_inner), f32) * 0.01
    w2 = jax.random.normal(ks[5], (d_model, d_inner), f32) * 0.05
    b2 = jax.random.normal(ks[6], (1, d_model), f32) * 0.01
    g1 = jnp.ones((1, d_model), f32)
    be1 = jnp.zeros((1, d_model), f32)
    g2 = jnp.ones((1, d_model), f32)
    be2 = jnp.zeros((1, d_model), f32)
    return dict(wq=wq, bq=bq, wk=wk, bk=bk, wo=wo, bo=bo,
                g1=g1, be1=be1, w1=w1, b1=b1, w2=w2, b2=b2,
                g2=g2, be2=be2)


if __name__ == "__main__":
    B, L, D = 2, 8, 32           # batch, seq, d_model
    n_heads, dk, dv = 2, 16, 16  # dk == dv (reference uses w_ks for V projection)
    d_inner = 64

    key = jax.random.PRNGKey(0)
    kx, kp = jax.random.split(key)
    x = jax.random.normal(kx, (B, L, D), jnp.float32)

    # batch 1 has its last 2 tokens padded
    pad = jnp.zeros((B, L), jnp.float32).at[1, L - 2:].set(1.0)   # 1.0 == padded
    non_pad_mask = (1.0 - pad)[:, :, None]                        # [B, L, 1]
    # attend-to-key mask: masked where key position is padded (broadcast over queries)
    self_attn_mask = jnp.broadcast_to(pad[:, None, :], (B, L, L)).astype(jnp.float32)

    params = init_params(kp, D, n_heads, dk, dv, d_inner)

    enc_out, attn = encoder_layer(x, non_pad_mask, self_attn_mask, params,
                                  n_heads=n_heads, dk=dk, dv=dv)
    jax.block_until_ready((enc_out, attn))
    assert enc_out.shape == (B, L, D)
    assert attn.shape == (n_heads * B, L, L)
    assert bool(jnp.all(jnp.isfinite(enc_out)))
    assert bool(jnp.all(jnp.isfinite(attn)))
    print("KERNEL_OK")
</pallas_src>

<mosaic_0001>
module attributes {stable_mosaic.version = 11 : i64} {
  func.func @encoder_layer_kernel(%arg0: i32, %arg1: memref<2x8x32xf32, #tpu.memory_space<vmem>>, %arg2: memref<2x8x1xf32, #tpu.memory_space<vmem>>, %arg3: memref<2x8x8xf32, #tpu.memory_space<vmem>>, %arg4: memref<2x32x16xbf16, #tpu.memory_space<vmem>>, %arg5: memref<2x1x16xf32, #tpu.memory_space<vmem>>, %arg6: memref<2x32x16xbf16, #tpu.memory_space<vmem>>, %arg7: memref<2x1x16xf32, #tpu.memory_space<vmem>>, %arg8: memref<2x16x32xbf16, #tpu.memory_space<vmem>>, %arg9: memref<1x32xf32, #tpu.memory_space<vmem>>, %arg10: memref<1x32xf32, #tpu.memory_space<vmem>>, %arg11: memref<1x32xf32, #tpu.memory_space<vmem>>, %arg12: memref<32x64xbf16, #tpu.memory_space<vmem>>, %arg13: memref<1x64xf32, #tpu.memory_space<vmem>>, %arg14: memref<64x32xbf16, #tpu.memory_space<vmem>>, %arg15: memref<1x32xf32, #tpu.memory_space<vmem>>, %arg16: memref<1x32xf32, #tpu.memory_space<vmem>>, %arg17: memref<1x32xf32, #tpu.memory_space<vmem>>, %arg18: memref<2x8x32xf32, #tpu.memory_space<vmem>>, %arg19: memref<2x2x8x8xf32, #tpu.memory_space<vmem>>) attributes {dimension_semantics = [#tpu.dimension_semantics<parallel>], iteration_bounds = array<i64: 1>, scalar_prefetch = 0 : i64, scratch_operands = 0 : i64, tpu.core_type = #tpu.core_type<tc>, window_params = [{transform_indices = @transform_0, window_bounds = array<i64: 2, 8, 32>}, {transform_indices = @transform_1, window_bounds = array<i64: 2, 8, 1>}, {transform_indices = @transform_2, window_bounds = array<i64: 2, 8, 8>}, {pipeline_mode = #tpu.pipeline_mode<synchronous>, transform_indices = @transform_3, window_bounds = array<i64: 2, 32, 16>}, {pipeline_mode = #tpu.pipeline_mode<synchronous>, transform_indices = @transform_4, window_bounds = array<i64: 2, 1, 16>}, {pipeline_mode = #tpu.pipeline_mode<synchronous>, transform_indices = @transform_5, window_bounds = array<i64: 2, 32, 16>}, {pipeline_mode = #tpu.pipeline_mode<synchronous>, transform_indices = @transform_6, window_bounds = array<i64: 2, 1, 16>}, {pipeline_mode = #tpu.pipeline_mode<synchronous>, transform_indices = @transform_7, window_bounds = array<i64: 2, 16, 32>}, {pipeline_mode = #tpu.pipeline_mode<synchronous>, transform_indices = @transform_8, window_bounds = array<i64: 1, 32>}, {pipeline_mode = #tpu.pipeline_mode<synchronous>, transform_indices = @transform_9, window_bounds = array<i64: 1, 32>}, {pipeline_mode = #tpu.pipeline_mode<synchronous>, transform_indices = @transform_10, window_bounds = array<i64: 1, 32>}, {pipeline_mode = #tpu.pipeline_mode<synchronous>, transform_indices = @transform_11, window_bounds = array<i64: 32, 64>}, {pipeline_mode = #tpu.pipeline_mode<synchronous>, transform_indices = @transform_12, window_bounds = array<i64: 1, 64>}, {pipeline_mode = #tpu.pipeline_mode<synchronous>, transform_indices = @transform_13, window_bounds = array<i64: 64, 32>}, {pipeline_mode = #tpu.pipeline_mode<synchronous>, transform_indices = @transform_14, window_bounds = array<i64: 1, 32>}, {pipeline_mode = #tpu.pipeline_mode<synchronous>, transform_indices = @transform_15, window_bounds = array<i64: 1, 32>}, {pipeline_mode = #tpu.pipeline_mode<synchronous>, transform_indices = @transform_16, window_bounds = array<i64: 1, 32>}, {transform_indices = @transform_17, window_bounds = array<i64: 2, 8, 32>}, {transform_indices = @transform_18, window_bounds = array<i64: 2, 2, 8, 8>}]} {
    %c0 = arith.constant 0 : index
    %c0_0 = arith.constant 0 : index
    %c0_1 = arith.constant 0 : index
    %0 = vector.load %arg1[%c0, %c0_0, %c0_1] : memref<2x8x32xf32, #tpu.memory_space<vmem>>, vector<2x8x32xf32>
    %1 = vector.shape_cast %0 : vector<2x8x32xf32> to vector<16x32xf32>
    %2 = arith.truncf %1 : vector<16x32xf32> to vector<16x32xbf16>
    %c0_2 = arith.constant 0 : index
    %c0_3 = arith.constant 0 : index
    %c0_4 = arith.constant 0 : index
    %3 = vector.load %arg2[%c0_2, %c0_3, %c0_4] : memref<2x8x1xf32, #tpu.memory_space<vmem>>, vector<2x8x1xf32>
    %4 = vector.shape_cast %3 : vector<2x8x1xf32> to vector<16x1xf32>
    %c0_5 = arith.constant 0 : index
    %c0_6 = arith.constant 0 : index
    %c0_7 = arith.constant 0 : index
    %5 = vector.load %arg3[%c0_5, %c0_6, %c0_7] : memref<2x8x8xf32, #tpu.memory_space<vmem>>, vector<2x8x8xf32>
    %cst = arith.constant 0.000000e+00 : f32
    %6 = vector.broadcast %cst : f32 to vector<2x8x8xf32>
    %7 = arith.cmpf ogt, %5, %6 : vector<2x8x8xf32>
    %c0_8 = arith.constant 0 : index
    %c0_9 = arith.constant 0 : index
    %8 = vector.load %arg9[%c0_8, %c0_9] : memref<1x32xf32, #tpu.memory_space<vmem>>, vector<1x32xf32>
    %9 = vector.broadcast %8 : vector<1x32xf32> to vector<16x32xf32>
    %10 = arith.addf %1, %9 : vector<16x32xf32>
    %c0_10 = arith.constant 0 : index
    %c0_11 = arith.constant 0 : index
    %c0_12 = arith.constant 0 : index
    %11 = vector.load %arg4[%c0_10, %c0_11, %c0_12] : memref<2x32x16xbf16, #tpu.memory_space<vmem>>, vector<1x32x16xbf16>
    %12 = vector.shape_cast %11 : vector<1x32x16xbf16> to vector<32x16xbf16>
    %cst_13 = arith.constant dense<0.000000e+00> : vector<16x16xf32>
    %13 = tpu.matmul %2, %12, %cst_13 {dimension_numbers = #tpu.dot_dimension_numbers<[1], [0], [0], [1], [0, 0, 1, 1], [], []>} : vector<16x32xbf16>, vector<32x16xbf16>, vector<16x16xf32> -> vector<16x16xf32>
    %c0_14 = arith.constant 0 : index
    %c0_15 = arith.constant 0 : index
    %c0_16 = arith.constant 0 : index
    %14 = vector.load %arg5[%c0_14, %c0_15, %c0_16] : memref<2x1x16xf32, #tpu.memory_space<vmem>>, vector<1x1x16xf32>
    %15 = vector.shape_cast %14 : vector<1x1x16xf32> to vector<1x16xf32>
    %16 = vector.broadcast %15 : vector<1x16xf32> to vector<16x16xf32>
    %17 = arith.addf %13, %16 : vector<16x16xf32>
    %c0_17 = arith.constant 0 : index
    %c0_18 = arith.constant 0 : index
    %c0_19 = arith.constant 0 : index
    %18 = vector.load %arg6[%c0_17, %c0_18, %c0_19] : memref<2x32x16xbf16, #tpu.memory_space<vmem>>, vector<1x32x16xbf16>
    %19 = vector.shape_cast %18 : vector<1x32x16xbf16> to vector<32x16xbf16>
    %cst_20 = arith.constant dense<0.000000e+00> : vector<16x16xf32>
    %20 = tpu.matmul %2, %19, %cst_20 {dimension_numbers = #tpu.dot_dimension_numbers<[1], [0], [0], [1], [0, 0, 1, 1], [], []>} : vector<16x32xbf16>, vector<32x16xbf16>, vector<16x16xf32> -> vector<16x16xf32>
    %c0_21 = arith.constant 0 : index
    %c0_22 = arith.constant 0 : index
    %c0_23 = arith.constant 0 : index
    %21 = vector.load %arg7[%c0_21, %c0_22, %c0_23] : memref<2x1x16xf32, #tpu.memory_space<vmem>>, vector<1x1x16xf32>
    %22 = vector.shape_cast %21 : vector<1x1x16xf32> to vector<1x16xf32>
    %23 = vector.broadcast %22 : vector<1x16xf32> to vector<16x16xf32>
    %24 = arith.addf %20, %23 : vector<16x16xf32>
    %25 = vector.shape_cast %17 : vector<16x16xf32> to vector<2x8x16xf32>
    %26 = arith.truncf %25 : vector<2x8x16xf32> to vector<2x8x16xbf16>
    %27 = vector.shape_cast %24 : vector<16x16xf32> to vector<2x8x16xf32>
    %28 = arith.truncf %27 : vector<2x8x16xf32> to vector<2x8x16xbf16>
    "tpu.trace_start"() <{level = 10 : i32, message = "bqd,bkd->bqk"}> : () -> ()
    %cst_24 = arith.constant dense<0.000000e+00> : vector<2x8x8xf32>
    %29 = tpu.matmul %26, %28, %cst_24 {dimension_numbers = #tpu.dot_dimension_numbers<[2], [2], [1], [1], [0, 0, 0, 1, 1, 1], [0], [0]>} : vector<2x8x16xbf16>, vector<2x8x16xbf16>, vector<2x8x8xf32> -> vector<2x8x8xf32>
    %cst_25 = arith.constant -1.000000e+30 : f32
    "tpu.trace_stop"() : () -> ()
    %30 = vector.broadcast %cst_25 : f32 to vector<2x8x8xf32>
    %31 = arith.select %7, %30, %29 : vector<2x8x8xi1>, vector<2x8x8xf32>
    %cst_26 = arith.constant dense<0xFF800000> : vector<2x8xf32>
    %32 = vector.multi_reduction <maximumf>, %31, %cst_26 [2] : vector<2x8x8xf32> to vector<2x8xf32>
    %33 = vector.shape_cast %32 : vector<2x8xf32> to vector<2x8x1xf32>
    %34 = vector.broadcast %33 : vector<2x8x1xf32> to vector<2x8x8xf32>
    %35 = arith.subf %31, %34 : vector<2x8x8xf32>
    %36 = math.exp %35 : vector<2x8x8xf32>
    %cst_27 = arith.constant dense<0.000000e+00> : vector<2x8xf32>
    %37 = vector.multi_reduction <add>, %36, %cst_27 [2] : vector<2x8x8xf32> to vector<2x8xf32>
    %38 = vector.shape_cast %37 : vector<2x8xf32> to vector<2x8x1xf32>
    %cst_28 = arith.constant 1.000000e+00 : f32
    %39 = vector.broadcast %cst_28 : f32 to vector<2x8x1xf32>
    %40 = arith.divf %39, %38 : vector<2x8x1xf32>
    %41 = vector.broadcast %40 : vector<2x8x1xf32> to vector<2x8x8xf32>
    %42 = arith.mulf %36, %41 : vector<2x8x8xf32>
    %c0_29 = arith.constant 0 : index
    %c0_30 = arith.constant 0 : index
    %c0_31 = arith.constant 0 : index
    %c0_32 = arith.constant 0 : index
    %43 = vector.load %arg19[%c0_29, %c0_30, %c0_31, %c0_32] : memref<2x2x8x8xf32, #tpu.memory_space<vmem>>, vector<1x2x8x8xf32>
    %44 = vector.shape_cast %43 : vector<1x2x8x8xf32> to vector<2x8x8xf32>
    %45 = vector.shape_cast %42 : vector<2x8x8xf32> to vector<1x2x8x8xf32>
    tpu.vector_store %arg19[%c0_29, %c0_30, %c0_31, %c0_32], %45 {strides = array<i32>} : memref<2x2x8x8xf32, #tpu.memory_space<vmem>>, vector<1x2x8x8xf32>,
    %46 = arith.truncf %42 : vector<2x8x8xf32> to vector<2x8x8xbf16>
    "tpu.trace_start"() <{level = 10 : i32, message = "bqk,bkd->bqd"}> : () -> ()
    %cst_33 = arith.constant dense<0.000000e+00> : vector<2x8x16xf32>
    %47 = tpu.matmul %46, %28, %cst_33 {dimension_numbers = #tpu.dot_dimension_numbers<[2], [1], [1], [2], [0, 0, 0, 1, 1, 2], [0], [0]>} : vector<2x8x8xbf16>, vector<2x8x16xbf16>, vector<2x8x16xf32> -> vector<2x8x16xf32>
    "tpu.trace_stop"() : () -> ()
    %48 = vector.shape_cast %47 : vector<2x8x16xf32> to vector<16x16xf32>
    %49 = arith.truncf %48 : vector<16x16xf32> to vector<16x16xbf16>
    %c0_34 = arith.constant 0 : index
    %c0_35 = arith.constant 0 : index
    %c0_36 = arith.constant 0 : index
    %50 = vector.load %arg8[%c0_34, %c0_35, %c0_36] : memref<2x16x32xbf16, #tpu.memory_space<vmem>>, vector<1x16x32xbf16>
    %51 = vector.shape_cast %50 : vector<1x16x32xbf16> to vector<16x32xbf16>
    %cst_37 = arith.constant dense<0.000000e+00> : vector<16x32xf32>
    %52 = tpu.matmul %49, %51, %cst_37 {dimension_numbers = #tpu.dot_dimension_numbers<[1], [0], [0], [1], [0, 0, 1, 1], [], []>} : vector<16x16xbf16>, vector<16x32xbf16>, vector<16x32xf32> -> vector<16x32xf32>
    %53 = arith.addf %10, %52 : vector<16x32xf32>
    %c1 = arith.constant 1 : index
    %c0_38 = arith.constant 0 : index
    %c0_39 = arith.constant 0 : index
    %54 = vector.load %arg4[%c1, %c0_38, %c0_39] : memref<2x32x16xbf16, #tpu.memory_space<vmem>>, vector<1x32x16xbf16>
    %55 = vector.shape_cast %54 : vector<1x32x16xbf16> to vector<32x16xbf16>
    %cst_40 = arith.constant dense<0.000000e+00> : vector<16x16xf32>
    %56 = tpu.matmul %2, %55, %cst_40 {dimension_numbers = #tpu.dot_dimension_numbers<[1], [0], [0], [1], [0, 0, 1, 1], [], []>} : vector<16x32xbf16>, vector<32x16xbf16>, vector<16x16xf32> -> vector<16x16xf32>
    %c1_41 = arith.constant 1 : index
    %c0_42 = arith.constant 0 : index
    %c0_43 = arith.constant 0 : index
    %57 = vector.load %arg5[%c1_41, %c0_42, %c0_43] : memref<2x1x16xf32, #tpu.memory_space<vmem>>, vector<1x1x16xf32>
    %58 = vector.shape_cast %57 : vector<1x1x16xf32> to vector<1x16xf32>
    %59 = vector.broadcast %58 : vector<1x16xf32> to vector<16x16xf32>
    %60 = arith.addf %56, %59 : vector<16x16xf32>
    %c1_44 = arith.constant 1 : index
    %c0_45 = arith.constant 0 : index
    %c0_46 = arith.constant 0 : index
    %61 = vector.load %arg6[%c1_44, %c0_45, %c0_46] : memref<2x32x16xbf16, #tpu.memory_space<vmem>>, vector<1x32x16xbf16>
    %62 = vector.shape_cast %61 : vector<1x32x16xbf16> to vector<32x16xbf16>
    %cst_47 = arith.constant dense<0.000000e+00> : vector<16x16xf32>
    %63 = tpu.matmul %2, %62, %cst_47 {dimension_numbers = #tpu.dot_dimension_numbers<[1], [0], [0], [1], [0, 0, 1, 1], [], []>} : vector<16x32xbf16>, vector<32x16xbf16>, vector<16x16xf32> -> vector<16x16xf32>
    %c1_48 = arith.constant 1 : index
    %c0_49 = arith.constant 0 : index
    %c0_50 = arith.constant 0 : index
    %64 = vector.load %arg7[%c1_48, %c0_49, %c0_50] : memref<2x1x16xf32, #tpu.memory_space<vmem>>, vector<1x1x16xf32>
    %65 = vector.shape_cast %64 : vector<1x1x16xf32> to vector<1x16xf32>
    %66 = vector.broadcast %65 : vector<1x16xf32> to vector<16x16xf32>
    %67 = arith.addf %63, %66 : vector<16x16xf32>
    %68 = vector.shape_cast %60 : vector<16x16xf32> to vector<2x8x16xf32>
    %69 = arith.truncf %68 : vector<2x8x16xf32> to vector<2x8x16xbf16>
    %70 = vector.shape_cast %67 : vector<16x16xf32> to vector<2x8x16xf32>
    %71 = arith.truncf %70 : vector<2x8x16xf32> to vector<2x8x16xbf16>
    "tpu.trace_start"() <{level = 10 : i32, message = "bqd,bkd->bqk"}> : () -> ()
    %cst_51 = arith.constant dense<0.000000e+00> : vector<2x8x8xf32>
    %72 = tpu.matmul %69, %71, %cst_51 {dimension_numbers = #tpu.dot_dimension_numbers<[2], [2], [1], [1], [0, 0, 0, 1, 1, 1], [0], [0]>} : vector<2x8x16xbf16>, vector<2x8x16xbf16>, vector<2x8x8xf32> -> vector<2x8x8xf32>
    %cst_52 = arith.constant -1.000000e+30 : f32
    "tpu.trace_stop"() : () -> ()
    %73 = vector.broadcast %cst_52 : f32 to vector<2x8x8xf32>
    %74 = arith.select %7, %73, %72 : vector<2x8x8xi1>, vector<2x8x8xf32>
    %cst_53 = arith.constant dense<0xFF800000> : vector<2x8xf32>
    %75 = vector.multi_reduction <maximumf>, %74, %cst_53 [2] : vector<2x8x8xf32> to vector<2x8xf32>
    %76 = vector.shape_cast %75 : vector<2x8xf32> to vector<2x8x1xf32>
    %77 = vector.broadcast %76 : vector<2x8x1xf32> to vector<2x8x8xf32>
    %78 = arith.subf %74, %77 : vector<2x8x8xf32>
    %79 = math.exp %78 : vector<2x8x8xf32>
    %cst_54 = arith.constant dense<0.000000e+00> : vector<2x8xf32>
    %80 = vector.multi_reduction <add>, %79, %cst_54 [2] : vector<2x8x8xf32> to vector<2x8xf32>
    %81 = vector.shape_cast %80 : vector<2x8xf32> to vector<2x8x1xf32>
    %cst_55 = arith.constant 1.000000e+00 : f32
    %82 = vector.broadcast %cst_55 : f32 to vector<2x8x1xf32>
    %83 = arith.divf %82, %81 : vector<2x8x1xf32>
    %84 = vector.broadcast %83 : vector<2x8x1xf32> to vector<2x8x8xf32>
    %85 = arith.mulf %79, %84 : vector<2x8x8xf32>
    %c1_56 = arith.constant 1 : index
    %c0_57 = arith.constant 0 : index
    %c0_58 = arith.constant 0 : index
    %c0_59 = arith.constant 0 : index
    %86 = vector.load %arg19[%c1_56, %c0_57, %c0_58, %c0_59] : memref<2x2x8x8xf32, #tpu.memory_space<vmem>>, vector<1x2x8x8xf32>
    %87 = vector.shape_cast %86 : vector<1x2x8x8xf32> to vector<2x8x8xf32>
    %88 = vector.shape_cast %85 : vector<2x8x8xf32> to vector<1x2x8x8xf32>
    tpu.vector_store %arg19[%c1_56, %c0_57, %c0_58, %c0_59], %88 {strides = array<i32>} : memref<2x2x8x8xf32, #tpu.memory_space<vmem>>, vector<1x2x8x8xf32>,
    %89 = arith.truncf %85 : vector<2x8x8xf32> to vector<2x8x8xbf16>
    "tpu.trace_start"() <{level = 10 : i32, message = "bqk,bkd->bqd"}> : () -> ()
    %cst_60 = arith.constant dense<0.000000e+00> : vector<2x8x16xf32>
    %90 = tpu.matmul %89, %71, %cst_60 {dimension_numbers = #tpu.dot_dimension_numbers<[2], [1], [1], [2], [0, 0, 0, 1, 1, 2], [0], [0]>} : vector<2x8x8xbf16>, vector<2x8x16xbf16>, vector<2x8x16xf32> -> vector<2x8x16xf32>
    "tpu.trace_stop"() : () -> ()
    %91 = vector.shape_cast %90 : vector<2x8x16xf32> to vector<16x16xf32>
    %92 = arith.truncf %91 : vector<16x16xf32> to vector<16x16xbf16>
    %c1_61 = arith.constant 1 : index
    %c0_62 = arith.constant 0 : index
    %c0_63 = arith.constant 0 : index
    %93 = vector.load %arg8[%c1_61, %c0_62, %c0_63] : memref<2x16x32xbf16, #tpu.memory_space<vmem>>, vector<1x16x32xbf16>
    %94 = vector.shape_cast %93 : vector<1x16x32xbf16> to vector<16x32xbf16>
    %cst_64 = arith.constant dense<0.000000e+00> : vector<16x32xf32>
    %95 = tpu.matmul %92, %94, %cst_64 {dimension_numbers = #tpu.dot_dimension_numbers<[1], [0], [0], [1], [0, 0, 1, 1], [], []>} : vector<16x16xbf16>, vector<16x32xbf16>, vector<16x32xf32> -> vector<16x32xf32>
    %96 = arith.addf %53, %95 : vector<16x32xf32>
    %cst_65 = arith.constant dense<0.000000e+00> : vector<16xf32>
    %97 = vector.multi_reduction <add>, %96, %cst_65 [1] : vector<16x32xf32> to vector<16xf32>
    %98 = vector.shape_cast %97 : vector<16xf32> to vector<16x1xf32>
    %cst_66 = arith.constant 3.200000e+01 : f32
    %99 = vector.broadcast %cst_66 : f32 to vector<16x1xf32>
    %100 = arith.divf %98, %99 : vector<16x1xf32>
    %101 = vector.broadcast %100 : vector<16x1xf32> to vector<16x32xf32>
    %102 = arith.subf %96, %101 : vector<16x32xf32>
    %103 = arith.mulf %102, %102 : vector<16x32xf32>
    %cst_67 = arith.constant dense<0.000000e+00> : vector<16xf32>
    %104 = vector.multi_reduction <add>, %103, %cst_67 [1] : vector<16x32xf32> to vector<16xf32>
    %105 = vector.shape_cast %104 : vector<16xf32> to vector<16x1xf32>
    %cst_68 = arith.constant 3.200000e+01 : f32
    %106 = vector.broadcast %cst_68 : f32 to vector<16x1xf32>
    %107 = arith.divf %105, %106 : vector<16x1xf32>
    %108 = vector.broadcast %100 : vector<16x1xf32> to vector<16x32xf32>
    %109 = arith.subf %96, %108 : vector<16x32xf32>
    %cst_69 = arith.constant 9.99999974E-6 : f32
    %110 = vector.broadcast %cst_69 : f32 to vector<16x1xf32>
    %111 = arith.addf %107, %110 : vector<16x1xf32>
    %112 = math.rsqrt %111 : vector<16x1xf32>
    %113 = vector.broadcast %112 : vector<16x1xf32> to vector<16x32xf32>
    %114 = arith.mulf %109, %113 : vector<16x32xf32>
    %c0_70 = arith.constant 0 : index
    %c0_71 = arith.constant 0 : index
    %115 = vector.load %arg10[%c0_70, %c0_71] : memref<1x32xf32, #tpu.memory_space<vmem>>, vector<1x32xf32>
    %116 = vector.broadcast %115 : vector<1x32xf32> to vector<16x32xf32>
    %117 = arith.mulf %114, %116 : vector<16x32xf32>
    %c0_72 = arith.constant 0 : index
    %c0_73 = arith.constant 0 : index
    %118 = vector.load %arg11[%c0_72, %c0_73] : memref<1x32xf32, #tpu.memory_space<vmem>>, vector<1x32xf32>
    %119 = vector.broadcast %118 : vector<1x32xf32> to vector<16x32xf32>
    %120 = arith.addf %117, %119 : vector<16x32xf32>
    %121 = vector.broadcast %4 : vector<16x1xf32> to vector<16x32xf32>
    %122 = arith.mulf %120, %121 : vector<16x32xf32>
    %123 = arith.truncf %122 : vector<16x32xf32> to vector<16x32xbf16>
    %c0_74 = arith.constant 0 : index
    %c0_75 = arith.constant 0 : index
    %124 = vector.load %arg12[%c0_74, %c0_75] : memref<32x64xbf16, #tpu.memory_space<vmem>>, vector<32x64xbf16>
    %cst_76 = arith.constant dense<0.000000e+00> : vector<16x64xf32>
    %125 = tpu.matmul %123, %124, %cst_76 {dimension_numbers = #tpu.dot_dimension_numbers<[1], [0], [0], [1], [0, 0, 1, 1], [], []>} : vector<16x32xbf16>, vector<32x64xbf16>, vector<16x64xf32> -> vector<16x64xf32>
    %c0_77 = arith.constant 0 : index
    %c0_78 = arith.constant 0 : index
    %126 = vector.load %arg13[%c0_77, %c0_78] : memref<1x64xf32, #tpu.memory_space<vmem>>, vector<1x64xf32>
    %127 = vector.broadcast %126 : vector<1x64xf32> to vector<16x64xf32>
    %128 = arith.addf %125, %127 : vector<16x64xf32>
    %cst_79 = arith.constant 0.000000e+00 : f32
    %129 = vector.broadcast %cst_79 : f32 to vector<16x64xf32>
    %130 = arith.maximumf %128, %129 : vector<16x64xf32>
    %131 = arith.truncf %130 : vector<16x64xf32> to vector<16x64xbf16>
    %c0_80 = arith.constant 0 : index
    %c0_81 = arith.constant 0 : index
    %132 = vector.load %arg14[%c0_80, %c0_81] : memref<64x32xbf16, #tpu.memory_space<vmem>>, vector<64x32xbf16>
    %cst_82 = arith.constant dense<0.000000e+00> : vector<16x32xf32>
    %133 = tpu.matmul %131, %132, %cst_82 {dimension_numbers = #tpu.dot_dimension_numbers<[1], [0], [0], [1], [0, 0, 1, 1], [], []>} : vector<16x64xbf16>, vector<64x32xbf16>, vector<16x32xf32> -> vector<16x32xf32>
    %c0_83 = arith.constant 0 : index
    %c0_84 = arith.constant 0 : index
    %134 = vector.load %arg15[%c0_83, %c0_84] : memref<1x32xf32, #tpu.memory_space<vmem>>, vector<1x32xf32>
    %135 = vector.broadcast %134 : vector<1x32xf32> to vector<16x32xf32>
    %136 = arith.addf %133, %135 : vector<16x32xf32>
    %137 = arith.addf %136, %122 : vector<16x32xf32>
    %cst_85 = arith.constant dense<0.000000e+00> : vector<16xf32>
    %138 = vector.multi_reduction <add>, %137, %cst_85 [1] : vector<16x32xf32> to vector<16xf32>
    %139 = vector.shape_cast %138 : vector<16xf32> to vector<16x1xf32>
    %cst_86 = arith.constant 3.200000e+01 : f32
    %140 = vector.broadcast %cst_86 : f32 to vector<16x1xf32>
    %141 = arith.divf %139, %140 : vector<16x1xf32>
    %142 = vector.broadcast %141 : vector<16x1xf32> to vector<16x32xf32>
    %143 = arith.subf %137, %142 : vector<16x32xf32>
    %144 = arith.mulf %143, %143 : vector<16x32xf32>
    %cst_87 = arith.constant dense<0.000000e+00> : vector<16xf32>
    %145 = vector.multi_reduction <add>, %144, %cst_87 [1] : vector<16x32xf32> to vector<16xf32>
    %146 = vector.shape_cast %145 : vector<16xf32> to vector<16x1xf32>
    %cst_88 = arith.constant 3.200000e+01 : f32
    %147 = vector.broadcast %cst_88 : f32 to vector<16x1xf32>
    %148 = arith.divf %146, %147 : vector<16x1xf32>
    %149 = vector.broadcast %141 : vector<16x1xf32> to vector<16x32xf32>
    %150 = arith.subf %137, %149 : vector<16x32xf32>
    %cst_89 = arith.constant 9.99999974E-6 : f32
    %151 = vector.broadcast %cst_89 : f32 to vector<16x1xf32>
    %152 = arith.addf %148, %151 : vector<16x1xf32>
    %153 = math.rsqrt %152 : vector<16x1xf32>
    %154 = vector.broadcast %153 : vector<16x1xf32> to vector<16x32xf32>
    %155 = arith.mulf %150, %154 : vector<16x32xf32>
    %c0_90 = arith.constant 0 : index
    %c0_91 = arith.constant 0 : index
    %156 = vector.load %arg16[%c0_90, %c0_91] : memref<1x32xf32, #tpu.memory_space<vmem>>, vector<1x32xf32>
    %157 = vector.broadcast %156 : vector<1x32xf32> to vector<16x32xf32>
    %158 = arith.mulf %155, %157 : vector<16x32xf32>
    %c0_92 = arith.constant 0 : index
    %c0_93 = arith.constant 0 : index
    %159 = vector.load %arg17[%c0_92, %c0_93] : memref<1x32xf32, #tpu.memory_space<vmem>>, vector<1x32xf32>
    %160 = vector.broadcast %159 : vector<1x32xf32> to vector<16x32xf32>
    %161 = arith.addf %158, %160 : vector<16x32xf32>
    %162 = vector.broadcast %4 : vector<16x1xf32> to vector<16x32xf32>
    %163 = arith.mulf %161, %162 : vector<16x32xf32>
    %164 = vector.shape_cast %163 : vector<16x32xf32> to vector<2x8x32xf32>
    %c0_94 = arith.constant 0 : index
    %c0_95 = arith.constant 0 : index
    %c0_96 = arith.constant 0 : index
    %165 = vector.load %arg18[%c0_94, %c0_95, %c0_96] : memref<2x8x32xf32, #tpu.memory_space<vmem>>, vector<2x8x32xf32>
    tpu.vector_store %arg18[%c0_94, %c0_95, %c0_96], %164 {strides = array<i32>} : memref<2x8x32xf32, #tpu.memory_space<vmem>>, vector<2x8x32xf32>,
    return
  }
  func.func @transform_0(%arg0: i32) -> (i32, i32, i32) {
    %c0_i32 = arith.constant 0 : i32
    %c0_i32_0 = arith.constant 0 : i32
    %c0_i32_1 = arith.constant 0 : i32
    return %arg0, %c0_i32, %c0_i32_0 : i32, i32, i32
  }
  func.func @transform_1(%arg0: i32) -> (i32, i32, i32) {
    %c0_i32 = arith.constant 0 : i32
    %c0_i32_0 = arith.constant 0 : i32
    %c0_i32_1 = arith.constant 0 : i32
    return %arg0, %c0_i32, %c0_i32_0 : i32, i32, i32
  }
  func.func @transform_2(%arg0: i32) -> (i32, i32, i32) {
    %c0_i32 = arith.constant 0 : i32
    %c0_i32_0 = arith.constant 0 : i32
    %c0_i32_1 = arith.constant 0 : i32
    return %arg0, %c0_i32, %c0_i32_0 : i32, i32, i32
  }
  func.func @transform_3(%arg0: i32) -> (i32, i32, i32) {
    %c0_i32 = arith.constant 0 : i32
    %c0_i32_0 = arith.constant 0 : i32
    %c0_i32_1 = arith.constant 0 : i32
    %c0_i32_2 = arith.constant 0 : i32
    return %c0_i32, %c0_i32_0, %c0_i32_1 : i32, i32, i32
  }
  func.func @transform_4(%arg0: i32) -> (i32, i32, i32) {
    %c0_i32 = arith.constant 0 : i32
    %c0_i32_0 = arith.constant 0 : i32
    %c0_i32_1 = arith.constant 0 : i32
    %c0_i32_2 = arith.constant 0 : i32
    return %c0_i32, %c0_i32_0, %c0_i32_1 : i32, i32, i32
  }
  func.func @transform_5(%arg0: i32) -> (i32, i32, i32) {
    %c0_i32 = arith.constant 0 : i32
    %c0_i32_0 = arith.constant 0 : i32
    %c0_i32_1 = arith.constant 0 : i32
    %c0_i32_2 = arith.constant 0 : i32
    return %c0_i32, %c0_i32_0, %c0_i32_1 : i32, i32, i32
  }
  func.func @transform_6(%arg0: i32) -> (i32, i32, i32) {
    %c0_i32 = arith.constant 0 : i32
    %c0_i32_0 = arith.constant 0 : i32
    %c0_i32_1 = arith.constant 0 : i32
    %c0_i32_2 = arith.constant 0 : i32
    return %c0_i32, %c0_i32_0, %c0_i32_1 : i32, i32, i32
  }
  func.func @transform_7(%arg0: i32) -> (i32, i32, i32) {
    %c0_i32 = arith.constant 0 : i32
    %c0_i32_0 = arith.constant 0 : i32
    %c0_i32_1 = arith.constant 0 : i32
    %c0_i32_2 = arith.constant 0 : i32
    return %c0_i32, %c0_i32_0, %c0_i32_1 : i32, i32, i32
  }
  func.func @transform_8(%arg0: i32) -> (i32, i32) {
    %c0_i32 = arith.constant 0 : i32
    %c0_i32_0 = arith.constant 0 : i32
    %c0_i32_1 = arith.constant 0 : i32
    return %c0_i32, %c0_i32_0 : i32, i32
  }
  func.func @transform_9(%arg0: i32) -> (i32, i32) {
    %c0_i32 = arith.constant 0 : i32
    %c0_i32_0 = arith.constant 0 : i32
    %c0_i32_1 = arith.constant 0 : i32
    return %c0_i32, %c0_i32_0 : i32, i32
  }
  func.func @transform_10(%arg0: i32) -> (i32, i32) {
    %c0_i32 = arith.constant 0 : i32
    %c0_i32_0 = arith.constant 0 : i32
    %c0_i32_1 = arith.constant 0 : i32
    return %c0_i32, %c0_i32_0 : i32, i32
  }
  func.func @transform_11(%arg0: i32) -> (i32, i32) {
    %c0_i32 = arith.constant 0 : i32
    %c0_i32_0 = arith.constant 0 : i32
    %c0_i32_1 = arith.constant 0 : i32
    return %c0_i32, %c0_i32_0 : i32, i32
  }
  func.func @transform_12(%arg0: i32) -> (i32, i32) {
    %c0_i32 = arith.constant 0 : i32
    %c0_i32_0 = arith.constant 0 : i32
    %c0_i32_1 = arith.constant 0 : i32
    return %c0_i32, %c0_i32_0 : i32, i32
  }
  func.func @transform_13(%arg0: i32) -> (i32, i32) {
    %c0_i32 = arith.constant 0 : i32
    %c0_i32_0 = arith.constant 0 : i32
    %c0_i32_1 = arith.constant 0 : i32
    return %c0_i32, %c0_i32_0 : i32, i32
  }
  func.func @transform_14(%arg0: i32) -> (i32, i32) {
    %c0_i32 = arith.constant 0 : i32
    %c0_i32_0 = arith.constant 0 : i32
    %c0_i32_1 = arith.constant 0 : i32
    return %c0_i32, %c0_i32_0 : i32, i32
  }
  func.func @transform_15(%arg0: i32) -> (i32, i32) {
    %c0_i32 = arith.constant 0 : i32
    %c0_i32_0 = arith.constant 0 : i32
    %c0_i32_1 = arith.constant 0 : i32
    return %c0_i32, %c0_i32_0 : i32, i32
  }
  func.func @transform_16(%arg0: i32) -> (i32, i32) {
    %c0_i32 = arith.constant 0 : i32
    %c0_i32_0 = arith.constant 0 : i32
    %c0_i32_1 = arith.constant 0 : i32
    return %c0_i32, %c0_i32_0 : i32, i32
  }
  func.func @transform_17(%arg0: i32) -> (i32, i32, i32) {
    %c0_i32 = arith.constant 0 : i32
    %c0_i32_0 = arith.constant 0 : i32
    %c0_i32_1 = arith.constant 0 : i32
    return %arg0, %c0_i32, %c0_i32_0 : i32, i32, i32
  }
  func.func @transform_18(%arg0: i32) -> (i32, i32, i32, i32) {
    %c0_i32 = arith.constant 0 : i32
    %c0_i32_0 = arith.constant 0 : i32
    %c0_i32_1 = arith.constant 0 : i32
    %c0_i32_2 = arith.constant 0 : i32
    return %c0_i32, %arg0, %c0_i32_0, %c0_i32_1 : i32, i32, i32, i32
  }
}

</mosaic_0001>

<llo_original>
// kernel: tpu_custom_call.1
$region0: #{tpu_custom_call.1}
  #allocation0 [shape = 'u32[]', space=smem, size = 0x4, offset = 0x4, fixed_abs, tag = 'smem constant byte address 0x4 - core index']
  #allocation1 [shape = 'u32[144,128]{1,0:T(1,128)}', space=vmem, size = 0x12000, scoped, tag = 'internal scratch']
  %s0 = inlined_call_operand.vmem [shape: f32[2,8,32], index: 0, kind: input, shape index: {}]
  %s1 = inlined_call_operand.vmem [shape: f32[2,8,1], index: 1, kind: input, shape index: {}]
  %s2 = inlined_call_operand.vmem [shape: f32[2,8,8], index: 2, kind: input, shape index: {}]
  %s3 = inlined_call_operand.vmem [shape: bf16[2,32,16], index: 3, kind: input, shape index: {}]
  %s4 = inlined_call_operand.vmem [shape: f32[2,1,16], index: 4, kind: input, shape index: {}]
  %s5 = inlined_call_operand.vmem [shape: bf16[2,32,16], index: 5, kind: input, shape index: {}]
  %s6 = inlined_call_operand.vmem [shape: f32[2,1,16], index: 6, kind: input, shape index: {}]
  %s7 = inlined_call_operand.vmem [shape: bf16[2,16,32], index: 7, kind: input, shape index: {}]
  %s8 = inlined_call_operand.vmem [shape: f32[1,32], index: 8, kind: input, shape index: {}]
  %s9 = inlined_call_operand.vmem [shape: f32[1,32], index: 9, kind: input, shape index: {}]
  %s10 = inlined_call_operand.vmem [shape: f32[1,32], index: 10, kind: input, shape index: {}]
  %s11 = inlined_call_operand.vmem [shape: bf16[32,64], index: 11, kind: input, shape index: {}]
  %s12 = inlined_call_operand.vmem [shape: f32[1,64], index: 12, kind: input, shape index: {}]
  %s13 = inlined_call_operand.vmem [shape: bf16[64,32], index: 13, kind: input, shape index: {}]
  %s14 = inlined_call_operand.vmem [shape: f32[1,32], index: 14, kind: input, shape index: {}]
  %s15 = inlined_call_operand.vmem [shape: f32[1,32], index: 15, kind: input, shape index: {}]
  %s16 = inlined_call_operand.vmem [shape: f32[1,32], index: 16, kind: input, shape index: {}]
  %s17 = inlined_call_operand.hbm [shape: f32[2,8,32], index: 17, kind: output, shape index: {0}]
  %s18 = inlined_call_operand.hbm [shape: f32[2,2,8,8], index: 18, kind: output, shape index: {1}]
  %19 = xla_tuple %s17, %s18
  %s20 = sld [smem:[#allocation0]]
  $region86: #{tpu_custom_call.1} parent=0
    _
  %s22 = ssub.s32 1, %s20
  %s23 = scalar_select 0, %s22, %s20
  $region1: #{tpu_custom_call.1} parent=0
    #allocation2 [shape = 'u8[8192]{0}', space=vmem, size = 0x2000, scoped, tag = 'output window, operand 0, single buffered']
    #allocation3 [shape = 's32[1]{0}', space=sflag, size = 0x4, scoped, tag = 'scoped memory for tpu_custom_call.1']
    #allocation4 [shape = 'u8[16384]{0}', space=vmem, size = 0x4000, scoped, tag = 'output window, operand 1, single buffered']
    #allocation5 [shape = 's32[1]{0}', space=sflag, size = 0x4, scoped, tag = 'scoped memory for tpu_custom_call.1']
    %24 = vsyncpa [#allocation3], 0
    %25 = vsyncpa [#allocation5], 0
    // Predicated region
    $region2: #{tpu_custom_call.1} parent=1 // pred_check
      _
    $region3: #{tpu_custom_call.1} parent=1 // pred_check_branch
      %27 = sbr.rel (0) target = $region5
    $region4: #{tpu_custom_call.1} parent=1 // pred_region
      _
    $region5: #{tpu_custom_call.1} parent=1 // pred_fallthru
      _
    // Predicated region
    $region6: #{tpu_custom_call.1} parent=1 // pred_check
      _
    $region7: #{tpu_custom_call.1} parent=1 // pred_check_branch
      %29 = sbr.rel (0) target = $region9
    $region8: #{tpu_custom_call.1} parent=1 // pred_region
      _
    $region9: #{tpu_custom_call.1} parent=1 // pred_fallthru
      _
    // Predicated region
    $region10: #{tpu_custom_call.1} parent=1 // pred_check
      _
    $region11: #{tpu_custom_call.1} parent=1 // pred_check_branch
      %31 = sbr.rel (0) target = $region13
    $region12: #{tpu_custom_call.1} parent=1 // pred_region
      _
    $region13: #{tpu_custom_call.1} parent=1 // pred_fallthru
      _
    // Predicated region
    $region14: #{tpu_custom_call.1} parent=1 // pred_check
      _
    $region15: #{tpu_custom_call.1} parent=1 // pred_check_branch
      %33 = sbr.rel (0) target = $region17
    $region16: #{tpu_custom_call.1} parent=1 // pred_region
      _
    $region17: #{tpu_custom_call.1} parent=1 // pred_fallthru
      _
    // Predicated region
    $region18: #{tpu_custom_call.1} parent=1 // pred_check
      _
    $region19: #{tpu_custom_call.1} parent=1 // pred_check_branch
      %35 = sbr.rel (0) target = $region21
    $region20: #{tpu_custom_call.1} parent=1 // pred_region
      _
    $region21: #{tpu_custom_call.1} parent=1 // pred_fallthru
      _
    // Predicated region
    $region22: #{tpu_custom_call.1} parent=1 // pred_check
      _
    $region23: #{tpu_custom_call.1} parent=1 // pred_check_branch
      %37 = sbr.rel (0) target = $region25
    $region24: #{tpu_custom_call.1} parent=1 // pred_region
      _
    $region25: #{tpu_custom_call.1} parent=1 // pred_fallthru
      _
    // Predicated region
    $region26: #{tpu_custom_call.1} parent=1 // pred_check
      _
    $region27: #{tpu_custom_call.1} parent=1 // pred_check_branch
      %39 = sbr.rel (0) target = $region29
    $region28: #{tpu_custom_call.1} parent=1 // pred_region
      _
    $region29: #{tpu_custom_call.1} parent=1 // pred_fallthru
      _
    // Predicated region
    $region30: #{tpu_custom_call.1} parent=1 // pred_check
      _
    $region31: #{tpu_custom_call.1} parent=1 // pred_check_branch
      %41 = sbr.rel (0) target = $region33
    $region32: #{tpu_custom_call.1} parent=1 // pred_region
      _
    $region33: #{tpu_custom_call.1} parent=1 // pred_fallthru
      _
    // Predicated region
    $region34: #{tpu_custom_call.1} parent=1 // pred_check
      _
    $region35: #{tpu_custom_call.1} parent=1 // pred_check_branch
      %43 = sbr.rel (0) target = $region37
    $region36: #{tpu_custom_call.1} parent=1 // pred_region
      _
    $region37: #{tpu_custom_call.1} parent=1 // pred_fallthru
      _
    // Predicated region
    $region38: #{tpu_custom_call.1} parent=1 // pred_check
      _
    $region39: #{tpu_custom_call.1} parent=1 // pred_check_branch
      %45 = sbr.rel (0) target = $region41
    $region40: #{tpu_custom_call.1} parent=1 // pred_region
      _
    $region41: #{tpu_custom_call.1} parent=1 // pred_fallthru
      _
    // Predicated region
    $region42: #{tpu_custom_call.1} parent=1 // pred_check
      _
    $region43: #{tpu_custom_call.1} parent=1 // pred_check_branch
      %47 = sbr.rel (0) target = $region45
    $region44: #{tpu_custom_call.1} parent=1 // pred_region
      _
    $region45: #{tpu_custom_call.1} parent=1 // pred_fallthru
      _
    // Predicated region
    $region46: #{tpu_custom_call.1} parent=1 // pred_check
      _
    $region47: #{tpu_custom_call.1} parent=1 // pred_check_branch
      %49 = sbr.rel (0) target = $region49
    $region48: #{tpu_custom_call.1} parent=1 // pred_region
      _
    $region49: #{tpu_custom_call.1} parent=1 // pred_fallthru
      _
    // Predicated region
    $region50: #{tpu_custom_call.1} parent=1 // pred_check
      _
    $region51: #{tpu_custom_call.1} parent=1 // pred_check_branch
      %51 = sbr.rel (0) target = $region53
    $region52: #{tpu_custom_call.1} parent=1 // pred_region
      _
    $region53: #{tpu_custom_call.1} parent=1 // pred_fallthru
      _
    // Predicated region
    $region54: #{tpu_custom_call.1} parent=1 // pred_check
      _
    $region55: #{tpu_custom_call.1} parent=1 // pred_check_branch
      %53 = sbr.rel (0) target = $region57
    $region56: #{tpu_custom_call.1} parent=1 // pred_region
      _
    $region57: #{tpu_custom_call.1} parent=1 // pred_fallthru
      _
    // Predicated region
    $region58: #{tpu_custom_call.1} parent=1 // pred_check
      _
    $region59: #{tpu_custom_call.1} parent=1 // pred_check_branch
      %55 = sbr.rel (0) target = $region61
    $region60: #{tpu_custom_call.1} parent=1 // pred_region
      _
    $region61: #{tpu_custom_call.1} parent=1 // pred_fallthru
      _
    // Predicated region
    $region62: #{tpu_custom_call.1} parent=1 // pred_check
      _
    $region63: #{tpu_custom_call.1} parent=1 // pred_check_branch
      %57 = sbr.rel (0) target = $region65
    $region64: #{tpu_custom_call.1} parent=1 // pred_region
      _
    $region65: #{tpu_custom_call.1} parent=1 // pred_fallthru
      _
    // Predicated region
    $region66: #{tpu_custom_call.1} parent=1 // pred_check
      _
    $region67: #{tpu_custom_call.1} parent=1 // pred_check_branch
      %59 = sbr.rel (0) target = $region69
    $region68: #{tpu_custom_call.1} parent=1 // pred_region
      _
    $region69: #{tpu_custom_call.1} parent=1 // pred_fallthru
      _
    %v61 = vld [vmem:[%s0] sm:$0xff]
    %v62 = vld [vmem:[%s0 + $0x8] sm:$0xff]
    %v63 = vpack.c.bf16 %v62, %v61
    %v64 = vld [vmem:[%s1] sm:$0xff]
    %v65 = vld [vmem:[%s1 + $0x8] sm:$0xff]
    %v66 = vld [vmem:[%s2] sm:$0xff]
    %v67 = vld [vmem:[%s2 + $0x8] sm:$0xff]
    %vm68 = vcmp.gt.f32.partialorder %v66, 0.0
    %vm69 = vcmp.gt.f32.partialorder %v67, 0.0
    %v70 = vld [vmem:[%s8] sm:$0x1]
    %v72 = vlaneseq
    %v73 = vshrl.u32 %v72, 7
    %v74 = vsub.s32 0, %v73
    %v75 = vrot.slane %v70, %v74
    %v77 = vadd.f32 %v61, %v75
    %v78 = vadd.f32 %v62, %v75
    %v79 = vld [vmem:[%s3] sm:$0xf]
    %v80 = vld [vmem:[%s3 + $0x4] sm:$0xf]
    %v81 = vld [vmem:[%s3 + $0x8] sm:$0xf]
    %v82 = vld [vmem:[%s3 + $0xc] sm:$0xf]
    %v83 = vld [vmem:[%s4] sm:$0x1]
    %v85 = vlaneseq
    %v86 = vshrl.u32 %v85, 7
    %v87 = vsub.s32 0, %v86
    %v88 = vrot.slane %v83, %v87
    %v94 = vunpack.c.l.b16 %v79
    %v95 = vunpack.c.l.b16 %v80
    %v96 = vunpack.c.l.b16 %v81
    %v97 = vunpack.c.l.b16 %v82
    %v98 = vpack.c.b16 %v95, %v94
    %v99 = vpack.c.b16 %v97, %v96
    %vm102 = vcmask 261120
    %v104 = vsel %vm102, %v63, 0
    %106 = vmatprep.subr.bf16.mxu0 0
    %107 = vmatpush1.bf16.msra.mxu0 0
    %108 = vmatprep.subr.bf16.mxu0 0
    %109 = vmatpush1.bf16.msra.mxu0 0
    %110 = vmatprep.subr.bf16.mxu0 0
    %111 = vmatpush1.bf16.msra.mxu0 0
    %112 = vmatprep.subr.bf16.mxu0 0
    %113 = vmatpush1.bf16.msra.mxu0 0
    %114 = vmatprep.subr.bf16.mxu0 0
    %115 = vmatpush1.bf16.msra.mxu0 0
    %116 = vmatprep.subr.bf16.mxu0 0
    %117 = vmatpush1.bf16.msra.mxu0 0
    %118 = vmatprep.subr.bf16.mxu0 0
    %119 = vmatpush1.bf16.msra.mxu0 %v99
    %120 = vmatprep.subr.bf16.mxu0 0
    %121 = vmatpush1.bf16.msra.mxu0 %v98
    %122 = vmatprep.subr.bf16.mxu0 0
    %123 = vmatpush2.bf16.msra.mxu0 0
    %124 = vmatprep.subr.bf16.mxu0 0
    %125 = vmatpush2.bf16.msra.mxu0 0
    %126 = vmatprep.subr.bf16.mxu0 0
    %127 = vmatpush2.bf16.msra.mxu0 0
    %128 = vmatprep.subr.bf16.mxu0 0
    %129 = vmatpush2.bf16.msra.mxu0 0
    %130 = vmatprep.subr.bf16.mxu0 0
    %131 = vmatpush2.bf16.msra.mxu0 0
    %132 = vmatprep.subr.bf16.mxu0 0
    %133 = vmatpush2.bf16.msra.mxu0 0
    %134 = vmatprep.subr.bf16.mxu0 0
    %135 = vmatpush2.bf16.msra.mxu0 0
    %136 = vmatprep.subr.bf16.mxu0 0
    %137 = vmatpush2.bf16.msra.mxu0 0
    %138 = vmatprep.mubr.bf16.mxu0 0
    %139 = vmatmul.mubr.bf16.gmra.mxu0 %v104
    %v140 = vpop.f32.mrf.mxu0
    %v141 = vadd.f32 %v88, %v140
    %v142 = vpop.f32.mrf.mxu0
    %v143 = vpop.f32.mrf.mxu0
    %v144 = vadd.f32 %v88, %v143
    %v145 = vpop.f32.mrf.mxu0
    %146 = vdwg.mxu0
    %v147 = vld [vmem:[%s5] sm:$0xf]
    %v148 = vld [vmem:[%s5 + $0x4] sm:$0xf]
    %v149 = vld [vmem:[%s5 + $0x8] sm:$0xf]
    %v150 = vld [vmem:[%s5 + $0xc] sm:$0xf]
    %v151 = vld [vmem:[%s6] sm:$0x1]
    %v153 = vlaneseq
    %v154 = vshrl.u32 %v153, 7
    %v155 = vsub.s32 0, %v154
    %v156 = vrot.slane %v151, %v155
    %v162 = vunpack.c.l.b16 %v147
    %v163 = vunpack.c.l.b16 %v148
    %v164 = vunpack.c.l.b16 %v149
    %v165 = vunpack.c.l.b16 %v150
    %v166 = vpack.c.b16 %v163, %v162
    %v167 = vpack.c.b16 %v165, %v164
    %170 = vmatprep.subr.bf16.mxu0 0
    %171 = vmatpush1.bf16.msra.mxu0 0
    %172 = vmatprep.subr.bf16.mxu0 0
    %173 = vmatpush1.bf16.msra.mxu0 0
    %174 = vmatprep.subr.bf16.mxu0 0
    %175 = vmatpush1.bf16.msra.mxu0 0
    %176 = vmatprep.subr.bf16.mxu0 0
    %177 = vmatpush1.bf16.msra.mxu0 0
    %178 = vmatprep.subr.bf16.mxu0 0
    %179 = vmatpush1.bf16.msra.mxu0 0
    %180 = vmatprep.subr.bf16.mxu0 0
    %181 = vmatpush1.bf16.msra.mxu0 0
    %182 = vmatprep.subr.bf16.mxu0 0
    %183 = vmatpush1.bf16.msra.mxu0 %v167
    %184 = vmatprep.subr.bf16.mxu0 0
    %185 = vmatpush1.bf16.msra.mxu0 %v166
    %186 = vmatprep.subr.bf16.mxu0 0
    %187 = vmatpush2.bf16.msra.mxu0 0
    %188 = vmatprep.subr.bf16.mxu0 0
    %189 = vmatpush2.bf16.msra.mxu0 0
    %190 = vmatprep.subr.bf16.mxu0 0
    %191 = vmatpush2.bf16.msra.mxu0 0
    %192 = vmatprep.subr.bf16.mxu0 0
    %193 = vmatpush2.bf16.msra.mxu0 0
    %194 = vmatprep.subr.bf16.mxu0 0
    %195 = vmatpush2.bf16.msra.mxu0 0
    %196 = vmatprep.subr.bf16.mxu0 0
    %197 = vmatpush2.bf16.msra.mxu0 0
    %198 = vmatprep.subr.bf16.mxu0 0
    %199 = vmatpush2.bf16.msra.mxu0 0
    %200 = vmatprep.subr.bf16.mxu0 0
    %201 = vmatpush2.bf16.msra.mxu0 0
    %202 = vmatprep.mubr.bf16.mxu0 0
    %203 = vmatmul.mubr.bf16.gmra.mxu0 %v104
    %v204 = vpop.f32.mrf.mxu0
    %v205 = vadd.f32 %v156, %v204
    %v206 = vpop.f32.mrf.mxu0
    %v207 = vpop.f32.mrf.mxu0
    %v208 = vadd.f32 %v156, %v207
    %v209 = vpop.f32.mrf.mxu0
    %210 = vdwg.mxu0
    %v211 = vpack.c.bf16 %v141, %v141
    %v212 = vpack.c.bf16 %v144, %v144
    %v213 = vpack.c.bf16 %v205, %v205
    %v214 = vpack.c.bf16 %v208, %v208
    %vm215 = vcmask 130048
    %v217 = vsel %vm215, %v211, 0
    %v220 = vsel %vm215, %v213, 0
    %222 = vmatprep.subr.bf16.mxu0 0
    %223 = vmatpush1.bf16.xpose.msra.mxu0 0
    %224 = vmatprep.subr.bf16.mxu0 0
    %225 = vmatpush1.bf16.xpose.msra.mxu0 0
    %226 = vmatprep.subr.bf16.mxu0 0
    %227 = vmatpush1.bf16.xpose.msra.mxu0 0
    %228 = vmatprep.subr.bf16.mxu0 0
    %229 = vmatpush1.bf16.xpose.msra.mxu0 0
    %230 = vmatprep.subr.bf16.mxu0 0
    %231 = vmatpush1.bf16.xpose.msra.mxu0 0
    %232 = vmatprep.subr.bf16.mxu0 0
    %233 = vmatpush1.bf16.xpose.msra.mxu0 0
    %234 = vmatprep.subr.bf16.mxu0 0
    %235 = vmatpush1.bf16.xpose.msra.mxu0 0
    %236 = vmatprep.subr.bf16.mxu0 0
    %237 = vmatpush1.bf16.xpose.msra.mxu0 %v220
    %238 = vmatprep.subr.bf16.mxu0 0
    %239 = vmatpush2.bf16.xpose.msra.mxu0 0
    %240 = vmatprep.subr.bf16.mxu0 0
    %241 = vmatpush2.bf16.xpose.msra.mxu0 0
    %242 = vmatprep.subr.bf16.mxu0 0
    %243 = vmatpush2.bf16.xpose.msra.mxu0 0
    %244 = vmatprep.subr.bf16.mxu0 0
    %245 = vmatpush2.bf16.xpose.msra.mxu0 0
    %246 = vmatprep.subr.bf16.mxu0 0
    %247 = vmatpush2.bf16.xpose.msra.mxu0 0
    %248 = vmatprep.subr.bf16.mxu0 0
    %249 = vmatpush2.bf16.xpose.msra.mxu0 0
    %250 = vmatprep.subr.bf16.mxu0 0
    %251 = vmatpush2.bf16.xpose.msra.mxu0 0
    %252 = vmatprep.subr.bf16.mxu0 0
    %253 = vmatpush2.bf16.xpose.msra.mxu0 0
    %254 = vmatprep.mubr.bf16.mxu0 0
    %255 = vmatmul.mubr.bf16.gmra.mxu0 %v217
    %v256 = vpop.f32.mrf.mxu0
    %v257 = vadd.f32 0.0, %v256
    %v258 = vpop.f32.mrf.mxu0
    %v259 = vpop.f32.mrf.mxu0
    %v260 = vpop.f32.mrf.mxu0
    %261 = vdwg.mxu0
    %v263 = vsel %vm215, %v212, 0
    %v266 = vsel %vm215, %v214, 0
    %268 = vmatprep.subr.bf16.mxu0 0
    %269 = vmatpush1.bf16.xpose.msra.mxu0 0
    %270 = vmatprep.subr.bf16.mxu0 0
    %271 = vmatpush1.bf16.xpose.msra.mxu0 0
    %272 = vmatprep.subr.bf16.mxu0 0
    %273 = vmatpush1.bf16.xpose.msra.mxu0 0
    %274 = vmatprep.subr.bf16.mxu0 0
    %275 = vmatpush1.bf16.xpose.msra.mxu0 0
    %276 = vmatprep.subr.bf16.mxu0 0
    %277 = vmatpush1.bf16.xpose.msra.mxu0 0
    %278 = vmatprep.subr.bf16.mxu0 0
    %279 = vmatpush1.bf16.xpose.msra.mxu0 0
    %280 = vmatprep.subr.bf16.mxu0 0
    %281 = vmatpush1.bf16.xpose.msra.mxu0 0
    %282 = vmatprep.subr.bf16.mxu0 0
    %283 = vmatpush1.bf16.xpose.msra.mxu0 %v266
    %284 = vmatprep.subr.bf16.mxu0 0
    %285 = vmatpush2.bf16.xpose.msra.mxu0 0
    %286 = vmatprep.subr.bf16.mxu0 0
    %287 = vmatpush2.bf16.xpose.msra.mxu0 0
    %288 = vmatprep.subr.bf16.mxu0 0
    %289 = vmatpush2.bf16.xpose.msra.mxu0 0
    %290 = vmatprep.subr.bf16.mxu0 0
    %291 = vmatpush2.bf16.xpose.msra.mxu0 0
    %292 = vmatprep.subr.bf16.mxu0 0
    %293 = vmatpush2.bf16.xpose.msra.mxu0 0
    %294 = vmatprep.subr.bf16.mxu0 0
    %295 = vmatpush2.bf16.xpose.msra.mxu0 0
    %296 = vmatprep.subr.bf16.mxu0 0
    %297 = vmatpush2.bf16.xpose.msra.mxu0 0
    %298 = vmatprep.subr.bf16.mxu0 0
    %299 = vmatpush2.bf16.xpose.msra.mxu0 0
    %300 = vmatprep.mubr.bf16.mxu0 0
    %301 = vmatmul.mubr.bf16.gmra.mxu0 %v263
    %v302 = vpop.f32.mrf.mxu0
    %v303 = vadd.f32 0.0, %v302
    %v304 = vpop.f32.mrf.mxu0
    %v305 = vpop.f32.mrf.mxu0
    %v306 = vpop.f32.mrf.mxu0
    %307 = vdwg.mxu0
    %v308 = vsel %vm68, -1e+30, %v257
    %v309 = vsel %vm69, -1e+30, %v303
    %vm310 = vcmask 64512
    %v311 = vsel %vm310, %v308, -inf
    %312 = vmax.xlane.f32.xlu0 %v311
    %v313 = vpop.xlane.xlu0 %312
    %v314 = vsel %vm310, %v309, -inf
    %315 = vmax.xlane.f32.xlu0 %v314
    %v316 = vpop.xlane.xlu0 %315
    %v317 = vsub.f32 %v308, %v313
    %v318 = vsub.f32 %v309, %v316
    %v319 = vmul.f32 %v317, 1.442695
    %v320 = vpow.pop %v319
    %v321 = vmul.f32 %v318, 1.442695
    %v322 = vpow.pop %v321
    %v323 = vsel %vm310, %v320, 0.0
    %324 = vadd.xlane.f32.xlu0 %v323
    %v325 = vpop.xlane.xlu0 %324
    %v326 = vsel %vm310, %v322, 0.0
    %327 = vadd.xlane.f32.xlu0 %v326
    %v328 = vpop.xlane.xlu0 %327
    %v329 = vrcp.pop %v325
    %v330 = vmul.f32 1.0, %v329
    %v331 = vrcp.pop %v328
    %v332 = vmul.f32 1.0, %v331
    %v333 = vmul.f32 %v320, %v330
    %v334 = vmul.f32 %v322, %v332
    %335 = vst.msk [vmem:[#allocation4] sm:$0xff] %vm310, %v333
    %336 = vst.msk [vmem:[#allocation4 + $0x8] sm:$0xff] %vm310, %v334
    %v337 = vpack.c.bf16 %v333, %v333
    %v338 = vpack.c.bf16 %v334, %v334
    %v340 = vsel %vm310, %v337, 0
    %vm342 = vcmask 1043456
    %v343 = vsel %vm342, %v213, 0
    %345 = vmatprep.subr.bf16.mxu0 0
    %346 = vmatpush1.bf16.msra.mxu0 0
    %347 = vmatprep.subr.bf16.mxu0 0
    %348 = vmatpush1.bf16.msra.mxu0 0
    %349 = vmatprep.subr.bf16.mxu0 0
    %350 = vmatpush1.bf16.msra.mxu0 0
    %351 = vmatprep.subr.bf16.mxu0 0
    %352 = vmatpush1.bf16.msra.mxu0 0
    %353 = vmatprep.subr.bf16.mxu0 0
    %354 = vmatpush1.bf16.msra.mxu0 0
    %355 = vmatprep.subr.bf16.mxu0 0
    %356 = vmatpush1.bf16.msra.mxu0 0
    %357 = vmatprep.subr.bf16.mxu0 0
    %358 = vmatpush1.bf16.msra.mxu0 0
    %359 = vmatprep.subr.bf16.mxu0 0
    %360 = vmatpush1.bf16.msra.mxu0 %v343
    %361 = vmatprep.subr.bf16.mxu0 0
    %362 = vmatpush2.bf16.msra.mxu0 0
    %363 = vmatprep.subr.bf16.mxu0 0
    %364 = vmatpush2.bf16.msra.mxu0 0
    %365 = vmatprep.subr.bf16.mxu0 0
    %366 = vmatpush2.bf16.msra.mxu0 0
    %367 = vmatprep.subr.bf16.mxu0 0
    %368 = vmatpush2.bf16.msra.mxu0 0
    %369 = vmatprep.subr.bf16.mxu0 0
    %370 = vmatpush2.bf16.msra.mxu0 0
    %371 = vmatprep.subr.bf16.mxu0 0
    %372 = vmatpush2.bf16.msra.mxu0 0
    %373 = vmatprep.subr.bf16.mxu0 0
    %374 = vmatpush2.bf16.msra.mxu0 0
    %375 = vmatprep.subr.bf16.mxu0 0
    %376 = vmatpush2.bf16.msra.mxu0 0
    %377 = vmatprep.mubr.bf16.mxu0 0
    %378 = vmatmul.mubr.bf16.gmra.mxu0 %v340
    %v379 = vpop.f32.mrf.mxu0
    %v380 = vadd.f32 0.0, %v379
    %v381 = vpop.f32.mrf.mxu0
    %v382 = vpop.f32.mrf.mxu0
    %v383 = vpop.f32.mrf.mxu0
    %384 = vdwg.mxu0
    %v386 = vsel %vm310, %v338, 0
    %v388 = vsel %vm342, %v214, 0
    %390 = vmatprep.subr.bf16.mxu0 0
    %391 = vmatpush1.bf16.msra.mxu0 0
    %392 = vmatprep.subr.bf16.mxu0 0
    %393 = vmatpush1.bf16.msra.mxu0 0
    %394 = vmatprep.subr.bf16.mxu0 0
    %395 = vmatpush1.bf16.msra.mxu0 0
    %396 = vmatprep.subr.bf16.mxu0 0
    %397 = vmatpush1.bf16.msra.mxu0 0
    %398 = vmatprep.subr.bf16.mxu0 0
    %399 = vmatpush1.bf16.msra.mxu0 0
    %400 = vmatprep.subr.bf16.mxu0 0
    %401 = vmatpush1.bf16.msra.mxu0 0
    %402 = vmatprep.subr.bf16.mxu0 0
    %403 = vmatpush1.bf16.msra.mxu0 0
    %404 = vmatprep.subr.bf16.mxu0 0
    %405 = vmatpush1.bf16.msra.mxu0 %v388
    %406 = vmatprep.subr.bf16.mxu0 0
    %407 = vmatpush2.bf16.msra.mxu0 0
    %408 = vmatprep.subr.bf16.mxu0 0
    %409 = vmatpush2.bf16.msra.mxu0 0
    %410 = vmatprep.subr.bf16.mxu0 0
    %411 = vmatpush2.bf16.msra.mxu0 0
    %412 = vmatprep.subr.bf16.mxu0 0
    %413 = vmatpush2.bf16.msra.mxu0 0
    %414 = vmatprep.subr.bf16.mxu0 0
    %415 = vmatpush2.bf16.msra.mxu0 0
    %416 = vmatprep.subr.bf16.mxu0 0
    %417 = vmatpush2.bf16.msra.mxu0 0
    %418 = vmatprep.subr.bf16.mxu0 0
    %419 = vmatpush2.bf16.msra.mxu0 0
    %420 = vmatprep.subr.bf16.mxu0 0
    %421 = vmatpush2.bf16.msra.mxu0 0
    %422 = vmatprep.mubr.bf16.mxu0 0
    %423 = vmatmul.mubr.bf16.gmra.mxu0 %v386
    %v424 = vpop.f32.mrf.mxu0
    %v425 = vadd.f32 0.0, %v424
    %v426 = vpop.f32.mrf.mxu0
    %v427 = vpop.f32.mrf.mxu0
    %v428 = vpop.f32.mrf.mxu0
    %429 = vdwg.mxu0
    %v430 = vpack.c.bf16 %v425, %v380
    %v431 = vld [vmem:[%s7] sm:$0xf]
    %v432 = vld [vmem:[%s7 + $0x4] sm:$0xf]
    %v435 = vunpack.c.l.b16 %v431
    %v436 = vunpack.c.l.b16 %v432
    %v437 = vpack.c.b16 %v436, %v435
    %v440 = vsel %vm215, %v430, 0
    %442 = vmatprep.subr.bf16.mxu0 0
    %443 = vmatpush1.bf16.msra.mxu0 0
    %444 = vmatprep.subr.bf16.mxu0 0
    %445 = vmatpush1.bf16.msra.mxu0 0
    %446 = vmatprep.subr.bf16.mxu0 0
    %447 = vmatpush1.bf16.msra.mxu0 0
    %448 = vmatprep.subr.bf16.mxu0 0
    %449 = vmatpush1.bf16.msra.mxu0 0
    %450 = vmatprep.subr.bf16.mxu0 0
    %451 = vmatpush1.bf16.msra.mxu0 0
    %452 = vmatprep.subr.bf16.mxu0 0
    %453 = vmatpush1.bf16.msra.mxu0 0
    %454 = vmatprep.subr.bf16.mxu0 0
    %455 = vmatpush1.bf16.msra.mxu0 0
    %456 = vmatprep.subr.bf16.mxu0 0
    %457 = vmatpush1.bf16.msra.mxu0 %v437
    %458 = vmatprep.subr.bf16.mxu0 0
    %459 = vmatpush2.bf16.msra.mxu0 0
    %460 = vmatprep.subr.bf16.mxu0 0
    %461 = vmatpush2.bf16.msra.mxu0 0
    %462 = vmatprep.subr.bf16.mxu0 0
    %463 = vmatpush2.bf16.msra.mxu0 0
    %464 = vmatprep.subr.bf16.mxu0 0
    %465 = vmatpush2.bf16.msra.mxu0 0
    %466 = vmatprep.subr.bf16.mxu0 0
    %467 = vmatpush2.bf16.msra.mxu0 0
    %468 = vmatprep.subr.bf16.mxu0 0
    %469 = vmatpush2.bf16.msra.mxu0 0
    %470 = vmatprep.subr.bf16.mxu0 0
    %471 = vmatpush2.bf16.msra.mxu0 0
    %472 = vmatprep.subr.bf16.mxu0 0
    %473 = vmatpush2.bf16.msra.mxu0 0
    %474 = vmatprep.mubr.bf16.mxu0 0
    %475 = vmatmul.mubr.bf16.gmra.mxu0 %v440
    %v476 = vpop.f32.mrf.mxu0
    %v477 = vadd.f32 0.0, %v476
    %v478 = vpop.f32.mrf.mxu0
    %v479 = vpop.f32.mrf.mxu0
    %v480 = vadd.f32 0.0, %v479
    %v481 = vpop.f32.mrf.mxu0
    %482 = vdwg.mxu0
    %v483 = vadd.f32 %v77, %v477
    %v484 = vadd.f32 %v78, %v480
    %s485 = scalar_lea.vmem %s3, 16
    %v486 = vld [vmem:[%s485] sm:$0xf]
    %v487 = vld [vmem:[%s485 + $0x4] sm:$0xf]
    %v488 = vld [vmem:[%s485 + $0x8] sm:$0xf]
    %v489 = vld [vmem:[%s485 + $0xc] sm:$0xf]
    %s490 = scalar_lea.vmem %s4, 1
    %v491 = vld [vmem:[%s490] sm:$0x1]
    %v493 = vlaneseq
    %v494 = vshrl.u32 %v493, 7
    %v495 = vsub.s32 0, %v494
    %v496 = vrot.slane %v491, %v495
    %v502 = vunpack.c.l.b16 %v486
    %v503 = vunpack.c.l.b16 %v487
    %v504 = vunpack.c.l.b16 %v488
    %v505 = vunpack.c.l.b16 %v489
    %v506 = vpack.c.b16 %v503, %v502
    %v507 = vpack.c.b16 %v505, %v504
    %510 = vmatprep.subr.bf16.mxu0 0
    %511 = vmatpush1.bf16.msra.mxu0 0
    %512 = vmatprep.subr.bf16.mxu0 0
    %513 = vmatpush1.bf16.msra.mxu0 0
    %514 = vmatprep.subr.bf16.mxu0 0
    %515 = vmatpush1.bf16.msra.mxu0 0
    %516 = vmatprep.subr.bf16.mxu0 0
    %517 = vmatpush1.bf16.msra.mxu0 0
    %518 = vmatprep.subr.bf16.mxu0 0
    %519 = vmatpush1.bf16.msra.mxu0 0
    %520 = vmatprep.subr.bf16.mxu0 0
    %521 = vmatpush1.bf16.msra.mxu0 0
    %522 = vmatprep.subr.bf16.mxu0 0
    %523 = vmatpush1.bf16.msra.mxu0 %v507
    %524 = vmatprep.subr.bf16.mxu0 0
    %525 = vmatpush1.bf16.msra.mxu0 %v506
    %526 = vmatprep.subr.bf16.mxu0 0
    %527 = vmatpush2.bf16.msra.mxu0 0
    %528 = vmatprep.subr.bf16.mxu0 0
    %529 = vmatpush2.bf16.msra.mxu0 0
    %530 = vmatprep.subr.bf16.mxu0 0
    %531 = vmatpush2.bf16.msra.mxu0 0
    %532 = vmatprep.subr.bf16.mxu0 0
    %533 = vmatpush2.bf16.msra.mxu0 0
    %534 = vmatprep.subr.bf16.mxu0 0
    %535 = vmatpush2.bf16.msra.mxu0 0
    %536 = vmatprep.subr.bf16.mxu0 0
    %537 = vmatpush2.bf16.msra.mxu0 0
    %538 = vmatprep.subr.bf16.mxu0 0
    %539 = vmatpush2.bf16.msra.mxu0 0
    %540 = vmatprep.subr.bf16.mxu0 0
    %541 = vmatpush2.bf16.msra.mxu0 0
    %542 = vmatprep.mubr.bf16.mxu0 0
    %543 = vmatmul.mubr.bf16.gmra.mxu0 %v104
    %v544 = vpop.f32.mrf.mxu0
    %v545 = vadd.f32 %v496, %v544
    %v546 = vpop.f32.mrf.mxu0
    %v547 = vpop.f32.mrf.mxu0
    %v548 = vadd.f32 %v496, %v547
    %v549 = vpop.f32.mrf.mxu0
    %550 = vdwg.mxu0
    %s551 = scalar_lea.vmem %s5, 16
    %v552 = vld [vmem:[%s551] sm:$0xf]
    %v553 = vld [vmem:[%s551 + $0x4] sm:$0xf]
    %v554 = vld [vmem:[%s551 + $0x8] sm:$0xf]
    %v555 = vld [vmem:[%s551 + $0xc] sm:$0xf]
    %s556 = scalar_lea.vmem %s6, 1
    %v557 = vld [vmem:[%s556] sm:$0x1]
    %v559 = vlaneseq
    %v560 = vshrl.u32 %v559, 7
    %v561 = vsub.s32 0, %v560
    %v562 = vrot.slane %v557, %v561
    %v568 = vunpack.c.l.b16 %v552
    %v569 = vunpack.c.l.b16 %v553
    %v570 = vunpack.c.l.b16 %v554
    %v571 = vunpack.c.l.b16 %v555
    %v572 = vpack.c.b16 %v569, %v568
    %v573 = vpack.c.b16 %v571, %v570
    %576 = vmatprep.subr.bf16.mxu0 0
    %577 = vmatpush1.bf16.msra.mxu0 0
    %578 = vmatprep.subr.bf16.mxu0 0
    %579 = vmatpush1.bf16.msra.mxu0 0
    %580 = vmatprep.subr.bf16.mxu0 0
    %581 = vmatpush1.bf16.msra.mxu0 0
    %582 = vmatprep.subr.bf16.mxu0 0
    %583 = vmatpush1.bf16.msra.mxu0 0
    %584 = vmatprep.subr.bf16.mxu0 0
    %585 = vmatpush1.bf16.msra.mxu0 0
    %586 = vmatprep.subr.bf16.mxu0 0
    %587 = vmatpush1.bf16.msra.mxu0 0
    %588 = vmatprep.subr.bf16.mxu0 0
    %589 = vmatpush1.bf16.msra.mxu0 %v573
    %590 = vmatprep.subr.bf16.mxu0 0
    %591 = vmatpush1.bf16.msra.mxu0 %v572
    %592 = vmatprep.subr.bf16.mxu0 0
    %593 = vmatpush2.bf16.msra.mxu0 0
    %594 = vmatprep.subr.bf16.mxu0 0
    %595 = vmatpush2.bf16.msra.mxu0 0
    %596 = vmatprep.subr.bf16.mxu0 0
    %597 = vmatpush2.bf16.msra.mxu0 0
    %598 = vmatprep.subr.bf16.mxu0 0
    %599 = vmatpush2.bf16.msra.mxu0 0
    %600 = vmatprep.subr.bf16.mxu0 0
    %601 = vmatpush2.bf16.msra.mxu0 0
    %602 = vmatprep.subr.bf16.mxu0 0
    %603 = vmatpush2.bf16.msra.mxu0 0
    %604 = vmatprep.subr.bf16.mxu0 0
    %605 = vmatpush2.bf16.msra.mxu0 0
    %606 = vmatprep.subr.bf16.mxu0 0
    %607 = vmatpush2.bf16.msra.mxu0 0
    %608 = vmatprep.mubr.bf16.mxu0 0
    %609 = vmatmul.mubr.bf16.gmra.mxu0 %v104
    %v610 = vpop.f32.mrf.mxu0
    %v611 = vadd.f32 %v562, %v610
    %v612 = vpop.f32.mrf.mxu0
    %v613 = vpop.f32.mrf.mxu0
    %v614 = vadd.f32 %v562, %v613
    %v615 = vpop.f32.mrf.mxu0
    %616 = vdwg.mxu0
    %v617 = vpack.c.bf16 %v545, %v545
    %v618 = vpack.c.bf16 %v548, %v548
    %v619 = vpack.c.bf16 %v611, %v611
    %v620 = vpack.c.bf16 %v614, %v614
    %v622 = vsel %vm215, %v617, 0
    %v625 = vsel %vm215, %v619, 0
    %627 = vmatprep.subr.bf16.mxu0 0
    %628 = vmatpush1.bf16.xpose.msra.mxu0 0
    %629 = vmatprep.subr.bf16.mxu0 0
    %630 = vmatpush1.bf16.xpose.msra.mxu0 0
    %631 = vmatprep.subr.bf16.mxu0 0
    %632 = vmatpush1.bf16.xpose.msra.mxu0 0
    %633 = vmatprep.subr.bf16.mxu0 0
    %634 = vmatpush1.bf16.xpose.msra.mxu0 0
    %635 = vmatprep.subr.bf16.mxu0 0
    %636 = vmatpush1.bf16.xpose.msra.mxu0 0
    %637 = vmatprep.subr.bf16.mxu0 0
    %638 = vmatpush1.bf16.xpose.msra.mxu0 0
    %639 = vmatprep.subr.bf16.mxu0 0
    %640 = vmatpush1.bf16.xpose.msra.mxu0 0
    %641 = vmatprep.subr.bf16.mxu0 0
    %642 = vmatpush1.bf16.xpose.msra.mxu0 %v625
    %643 = vmatprep.subr.bf16.mxu0 0
    %644 = vmatpush2.bf16.xpose.msra.mxu0 0
    %645 = vmatprep.subr.bf16.mxu0 0
    %646 = vmatpush2.bf16.xpose.msra.mxu0 0
    %647 = vmatprep.subr.bf16.mxu0 0
    %648 = vmatpush2.bf16.xpose.msra.mxu0 0
    %649 = vmatprep.subr.bf16.mxu0 0
    %650 = vmatpush2.bf16.xpose.msra.mxu0 0
    %651 = vmatprep.subr.bf16.mxu0 0
    %652 = vmatpush2.bf16.xpose.msra.mxu0 0
    %653 = vmatprep.subr.bf16.mxu0 0
    %654 = vmatpush2.bf16.xpose.msra.mxu0 0
    %655 = vmatprep.subr.bf16.mxu0 0
    %656 = vmatpush2.bf16.xpose.msra.mxu0 0
    %657 = vmatprep.subr.bf16.mxu0 0
    %658 = vmatpush2.bf16.xpose.msra.mxu0 0
    %659 = vmatprep.mubr.bf16.mxu0 0
    %660 = vmatmul.mubr.bf16.gmra.mxu0 %v622
    %v661 = vpop.f32.mrf.mxu0
    %v662 = vadd.f32 0.0, %v661
    %v663 = vpop.f32.mrf.mxu0
    %v664 = vpop.f32.mrf.mxu0
    %v665 = vpop.f32.mrf.mxu0
    %666 = vdwg.mxu0
    %v668 = vsel %vm215, %v618, 0
    %v671 = vsel %vm215, %v620, 0
    %673 = vmatprep.subr.bf16.mxu0 0
    %674 = vmatpush1.bf16.xpose.msra.mxu0 0
    %675 = vmatprep.subr.bf16.mxu0 0
    %676 = vmatpush1.bf16.xpose.msra.mxu0 0
    %677 = vmatprep.subr.bf16.mxu0 0
    %678 = vmatpush1.bf16.xpose.msra.mxu0 0
    %679 = vmatprep.subr.bf16.mxu0 0
    %680 = vmatpush1.bf16.xpose.msra.mxu0 0
    %681 = vmatprep.subr.bf16.mxu0 0
    %682 = vmatpush1.bf16.xpose.msra.mxu0 0
    %683 = vmatprep.subr.bf16.mxu0 0
    %684 = vmatpush1.bf16.xpose.msra.mxu0 0
    %685 = vmatprep.subr.bf16.mxu0 0
    %686 = vmatpush1.bf16.xpose.msra.mxu0 0
    %687 = vmatprep.subr.bf16.mxu0 0
    %688 = vmatpush1.bf16.xpose.msra.mxu0 %v671
    %689 = vmatprep.subr.bf16.mxu0 0
    %690 = vmatpush2.bf16.xpose.msra.mxu0 0
    %691 = vmatprep.subr.bf16.mxu0 0
    %692 = vmatpush2.bf16.xpose.msra.mxu0 0
    %693 = vmatprep.subr.bf16.mxu0 0
    %694 = vmatpush2.bf16.xpose.msra.mxu0 0
    %695 = vmatprep.subr.bf16.mxu0 0
    %696 = vmatpush2.bf16.xpose.msra.mxu0 0
    %697 = vmatprep.subr.bf16.mxu0 0
    %698 = vmatpush2.bf16.xpose.msra.mxu0 0
    %699 = vmatprep.subr.bf16.mxu0 0
    %700 = vmatpush2.bf16.xpose.msra.mxu0 0
    %701 = vmatprep.subr.bf16.mxu0 0
    %702 = vmatpush2.bf16.xpose.msra.mxu0 0
    %703 = vmatprep.subr.bf16.mxu0 0
    %704 = vmatpush2.bf16.xpose.msra.mxu0 0
    %705 = vmatprep.mubr.bf16.mxu0 0
    %706 = vmatmul.mubr.bf16.gmra.mxu0 %v668
    %v707 = vpop.f32.mrf.mxu0
    %v708 = vadd.f32 0.0, %v707
    %v709 = vpop.f32.mrf.mxu0
    %v710 = vpop.f32.mrf.mxu0
    %v711 = vpop.f32.mrf.mxu0
    %712 = vdwg.mxu0
    %v713 = vsel %vm68, -1e+30, %v662
    %v714 = vsel %vm69, -1e+30, %v708
    %v715 = vsel %vm310, %v713, -inf
    %716 = vmax.xlane.f32.xlu0 %v715
    %v717 = vpop.xlane.xlu0 %716
    %v718 = vsel %vm310, %v714, -inf
    %719 = vmax.xlane.f32.xlu0 %v718
    %v720 = vpop.xlane.xlu0 %719
    %v721 = vsub.f32 %v713, %v717
    %v722 = vsub.f32 %v714, %v720
    %v723 = vmul.f32 %v721, 1.442695
    %v724 = vpow.pop %v723
    %v725 = vmul.f32 %v722, 1.442695
    %v726 = vpow.pop %v725
    %v727 = vsel %vm310, %v724, 0.0
    %728 = vadd.xlane.f32.xlu0 %v727
    %v729 = vpop.xlane.xlu0 %728
    %v730 = vsel %vm310, %v726, 0.0
    %731 = vadd.xlane.f32.xlu0 %v730
    %v732 = vpop.xlane.xlu0 %731
    %v733 = vrcp.pop %v729
    %v734 = vmul.f32 1.0, %v733
    %v735 = vrcp.pop %v732
    %v736 = vmul.f32 1.0, %v735
    %v737 = vmul.f32 %v724, %v734
    %v738 = vmul.f32 %v726, %v736
    %s739 = scalar_lea.vmem [#allocation4], 16
    %740 = vst.msk [vmem:[%s739] sm:$0xff] %vm310, %v737
    %741 = vst.msk [vmem:[%s739 + $0x8] sm:$0xff] %vm310, %v738
    %v742 = vpack.c.bf16 %v737, %v737
    %v743 = vpack.c.bf16 %v738, %v738
    %v745 = vsel %vm310, %v742, 0
    %v747 = vsel %vm342, %v619, 0
    %749 = vmatprep.subr.bf16.mxu0 0
    %750 = vmatpush1.bf16.msra.mxu0 0
    %751 = vmatprep.subr.bf16.mxu0 0
    %752 = vmatpush1.bf16.msra.mxu0 0
    %753 = vmatprep.subr.bf16.mxu0 0
    %754 = vmatpush1.bf16.msra.mxu0 0
    %755 = vmatprep.subr.bf16.mxu0 0
    %756 = vmatpush1.bf16.msra.mxu0 0
    %757 = vmatprep.subr.bf16.mxu0 0
    %758 = vmatpush1.bf16.msra.mxu0 0
    %759 = vmatprep.subr.bf16.mxu0 0
    %760 = vmatpush1.bf16.msra.mxu0 0
    %761 = vmatprep.subr.bf16.mxu0 0
    %762 = vmatpush1.bf16.msra.mxu0 0
    %763 = vmatprep.subr.bf16.mxu0 0
    %764 = vmatpush1.bf16.msra.mxu0 %v747
    %765 = vmatprep.subr.bf16.mxu0 0
    %766 = vmatpush2.bf16.msra.mxu0 0
    %767 = vmatprep.subr.bf16.mxu0 0
    %768 = vmatpush2.bf16.msra.mxu0 0
    %769 = vmatprep.subr.bf16.mxu0 0
    %770 = vmatpush2.bf16.msra.mxu0 0
    %771 = vmatprep.subr.bf16.mxu0 0
    %772 = vmatpush2.bf16.msra.mxu0 0
    %773 = vmatprep.subr.bf16.mxu0 0
    %774 = vmatpush2.bf16.msra.mxu0 0
    %775 = vmatprep.subr.bf16.mxu0 0
    %776 = vmatpush2.bf16.msra.mxu0 0
    %777 = vmatprep.subr.bf16.mxu0 0
    %778 = vmatpush2.bf16.msra.mxu0 0
    %779 = vmatprep.subr.bf16.mxu0 0
    %780 = vmatpush2.bf16.msra.mxu0 0
    %781 = vmatprep.mubr.bf16.mxu0 0
    %782 = vmatmul.mubr.bf16.gmra.mxu0 %v745
    %v783 = vpop.f32.mrf.mxu0
    %v784 = vadd.f32 0.0, %v783
    %v785 = vpop.f32.mrf.mxu0
    %v786 = vpop.f32.mrf.mxu0
    %v787 = vpop.f32.mrf.mxu0
    %788 = vdwg.mxu0
    %v790 = vsel %vm310, %v743, 0
    %v792 = vsel %vm342, %v620, 0
    %794 = vmatprep.subr.bf16.mxu0 0
    %795 = vmatpush1.bf16.msra.mxu0 0
    %796 = vmatprep.subr.bf16.mxu0 0
    %797 = vmatpush1.bf16.msra.mxu0 0
    %798 = vmatprep.subr.bf16.mxu0 0
    %799 = vmatpush1.bf16.msra.mxu0 0
    %800 = vmatprep.subr.bf16.mxu0 0
    %801 = vmatpush1.bf16.msra.mxu0 0
    %802 = vmatprep.subr.bf16.mxu0 0
    %803 = vmatpush1.bf16.msra.mxu0 0
    %804 = vmatprep.subr.bf16.mxu0 0
    %805 = vmatpush1.bf16.msra.mxu0 0
    %806 = vmatprep.subr.bf16.mxu0 0
    %807 = vmatpush1.bf16.msra.mxu0 0
    %808 = vmatprep.subr.bf16.mxu0 0
    %809 = vmatpush1.bf16.msra.mxu0 %v792
    %810 = vmatprep.subr.bf16.mxu0 0
    %811 = vmatpush2.bf16.msra.mxu0 0
    %812 = vmatprep.subr.bf16.mxu0 0
    %813 = vmatpush2.bf16.msra.mxu0 0
    %814 = vmatprep.subr.bf16.mxu0 0
    %815 = vmatpush2.bf16.msra.mxu0 0
    %816 = vmatprep.subr.bf16.mxu0 0
    %817 = vmatpush2.bf16.msra.mxu0 0
    %818 = vmatprep.subr.bf16.mxu0 0
    %819 = vmatpush2.bf16.msra.mxu0 0
    %820 = vmatprep.subr.bf16.mxu0 0
    %821 = vmatpush2.bf16.msra.mxu0 0
    %822 = vmatprep.subr.bf16.mxu0 0
    %823 = vmatpush2.bf16.msra.mxu0 0
    %824 = vmatprep.subr.bf16.mxu0 0
    %825 = vmatpush2.bf16.msra.mxu0 0
    %826 = vmatprep.mubr.bf16.mxu0 0
    %827 = vmatmul.mubr.bf16.gmra.mxu0 %v790
    %v828 = vpop.f32.mrf.mxu0
    %v829 = vadd.f32 0.0, %v828
    %v830 = vpop.f32.mrf.mxu0
    %v831 = vpop.f32.mrf.mxu0
    %v832 = vpop.f32.mrf.mxu0
    %833 = vdwg.mxu0
    %v834 = vpack.c.bf16 %v829, %v784
    %s835 = scalar_lea.vmem %s7, 8
    %v836 = vld [vmem:[%s835] sm:$0xf]
    %v837 = vld [vmem:[%s835 + $0x4] sm:$0xf]
    %v840 = vunpack.c.l.b16 %v836
    %v841 = vunpack.c.l.b16 %v837
    %v842 = vpack.c.b16 %v841, %v840
    %v845 = vsel %vm215, %v834, 0
    %847 = vmatprep.subr.bf16.mxu0 0
    %848 = vmatpush1.bf16.msra.mxu0 0
    %849 = vmatprep.subr.bf16.mxu0 0
    %850 = vmatpush1.bf16.msra.mxu0 0
    %851 = vmatprep.subr.bf16.mxu0 0
    %852 = vmatpush1.bf16.msra.mxu0 0
    %853 = vmatprep.subr.bf16.mxu0 0
    %854 = vmatpush1.bf16.msra.mxu0 0
    %855 = vmatprep.subr.bf16.mxu0 0
    %856 = vmatpush1.bf16.msra.mxu0 0
    %857 = vmatprep.subr.bf16.mxu0 0
    %858 = vmatpush1.bf16.msra.mxu0 0
    %859 = vmatprep.subr.bf16.mxu0 0
    %860 = vmatpush1.bf16.msra.mxu0 0
    %861 = vmatprep.subr.bf16.mxu0 0
    %862 = vmatpush1.bf16.msra.mxu0 %v842
    %863 = vmatprep.subr.bf16.mxu0 0
    %864 = vmatpush2.bf16.msra.mxu0 0
    %865 = vmatprep.subr.bf16.mxu0 0
    %866 = vmatpush2.bf16.msra.mxu0 0
    %867 = vmatprep.subr.bf16.mxu0 0
    %868 = vmatpush2.bf16.msra.mxu0 0
    %869 = vmatprep.subr.bf16.mxu0 0
    %870 = vmatpush2.bf16.msra.mxu0 0
    %871 = vmatprep.subr.bf16.mxu0 0
    %872 = vmatpush2.bf16.msra.mxu0 0
    %873 = vmatprep.subr.bf16.mxu0 0
    %874 = vmatpush2.bf16.msra.mxu0 0
    %875 = vmatprep.subr.bf16.mxu0 0
    %876 = vmatpush2.bf16.msra.mxu0 0
    %877 = vmatprep.subr.bf16.mxu0 0
    %878 = vmatpush2.bf16.msra.mxu0 0
    %879 = vmatprep.mubr.bf16.mxu0 0
    %880 = vmatmul.mubr.bf16.gmra.mxu0 %v845
    %v881 = vpop.f32.mrf.mxu0
    %v882 = vadd.f32 0.0, %v881
    %v883 = vpop.f32.mrf.mxu0
    %v884 = vpop.f32.mrf.mxu0
    %v885 = vadd.f32 0.0, %v884
    %v886 = vpop.f32.mrf.mxu0
    %887 = vdwg.mxu0
    %v888 = vadd.f32 %v483, %v882
    %v889 = vadd.f32 %v484, %v885
    %v890 = vsel %vm102, %v888, 0.0
    %891 = vadd.xlane.f32.xlu0 %v890
    %v892 = vpop.xlane.xlu0 %891
    %v893 = vsel %vm102, %v889, 0.0
    %894 = vadd.xlane.f32.xlu0 %v893
    %v895 = vpop.xlane.xlu0 %894
    %v896 = vrcp.pop 32.0
    %v897 = vmul.f32 %v892, %v896
    %v898 = vmul.f32 %v895, %v896
    %v899 = vsub.f32 %v888, %v897
    %v900 = vsub.f32 %v889, %v898
    %v901 = vmul.f32 %v899, %v899
    %v902 = vmul.f32 %v900, %v900
    %v903 = vsel %vm102, %v901, 0.0
    %904 = vadd.xlane.f32.xlu0 %v903
    %v905 = vpop.xlane.xlu0 %904
    %v906 = vsel %vm102, %v902, 0.0
    %907 = vadd.xlane.f32.xlu0 %v906
    %v908 = vpop.xlane.xlu0 %907
    %v909 = vmul.f32 %v905, %v896
    %v910 = vmul.f32 %v908, %v896
    %v911 = vadd.f32 %v909, 1e-05
    %v912 = vadd.f32 %v910, 1e-05
    %v913 = vrsqrt.pop %v911
    %v914 = vrsqrt.pop %v912
    %v915 = vmul.f32 %v899, %v913
    %v916 = vmul.f32 %v900, %v914
    %v917 = vld [vmem:[%s9] sm:$0x1]
    %v919 = vlaneseq
    %v920 = vshrl.u32 %v919, 7
    %v921 = vsub.s32 0, %v920
    %v922 = vrot.slane %v917, %v921
    %v924 = vmul.f32 %v915, %v922
    %v925 = vmul.f32 %v916, %v922
    %v926 = vld [vmem:[%s10] sm:$0x1]
    %v928 = vlaneseq
    %v929 = vshrl.u32 %v928, 7
    %v930 = vsub.s32 0, %v929
    %v931 = vrot.slane %v926, %v930
    %v933 = vadd.f32 %v924, %v931
    %v934 = vadd.f32 %v925, %v931
    %936 = vset.pattern.permute.xlu0 0
    %937 = vperm.xlu0 %936, %v64
    %v938 = vpop.permute.xlu0 %937
    %941 = vset.pattern.permute.xlu0 0
    %942 = vperm.xlu0 %941, %v65
    %v943 = vpop.permute.xlu0 %942
    %v945 = vmul.f32 %v933, %v938
    %v946 = vmul.f32 %v934, %v943
    %v947 = vpack.c.bf16 %v946, %v945
    %v948 = vld [vmem:[%s11] sm:$0xf]
    %v949 = vld [vmem:[%s11 + $0x4] sm:$0xf]
    %v950 = vld [vmem:[%s11 + $0x8] sm:$0xf]
    %v951 = vld [vmem:[%s11 + $0xc] sm:$0xf]
    %v952 = vld [vmem:[%s12] sm:$0x1]
    %v954 = vlaneseq
    %v955 = vshrl.u32 %v954, 7
    %v956 = vsub.s32 0, %v955
    %v957 = vrot.slane %v952, %v956
    %v963 = vunpack.c.l.b16 %v948
    %v964 = vunpack.c.l.b16 %v949
    %v965 = vunpack.c.l.b16 %v950
    %v966 = vunpack.c.l.b16 %v951
    %v967 = vpack.c.b16 %v964, %v963
    %v968 = vpack.c.b16 %v966, %v965
    %v972 = vsel %vm102, %v947, 0
    %974 = vmatprep.subr.bf16.mxu0 0
    %975 = vmatpush1.bf16.msra.mxu0 0
    %976 = vmatprep.subr.bf16.mxu0 0
    %977 = vmatpush1.bf16.msra.mxu0 0
    %978 = vmatprep.subr.bf16.mxu0 0
    %979 = vmatpush1.bf16.msra.mxu0 0
    %980 = vmatprep.subr.bf16.mxu0 0
    %981 = vmatpush1.bf16.msra.mxu0 0
    %982 = vmatprep.subr.bf16.mxu0 0
    %983 = vmatpush1.bf16.msra.mxu0 0
    %984 = vmatprep.subr.bf16.mxu0 0
    %985 = vmatpush1.bf16.msra.mxu0 0
    %986 = vmatprep.subr.bf16.mxu0 0
    %987 = vmatpush1.bf16.msra.mxu0 %v968
    %988 = vmatprep.subr.bf16.mxu0 0
    %989 = vmatpush1.bf16.msra.mxu0 %v967
    %990 = vmatprep.subr.bf16.mxu0 0
    %991 = vmatpush2.bf16.msra.mxu0 0
    %992 = vmatprep.subr.bf16.mxu0 0
    %993 = vmatpush2.bf16.msra.mxu0 0
    %994 = vmatprep.subr.bf16.mxu0 0
    %995 = vmatpush2.bf16.msra.mxu0 0
    %996 = vmatprep.subr.bf16.mxu0 0
    %997 = vmatpush2.bf16.msra.mxu0 0
    %998 = vmatprep.subr.bf16.mxu0 0
    %999 = vmatpush2.bf16.msra.mxu0 0
    %1000 = vmatprep.subr.bf16.mxu0 0
    %1001 = vmatpush2.bf16.msra.mxu0 0
    %1002 = vmatprep.subr.bf16.mxu0 0
    %1003 = vmatpush2.bf16.msra.mxu0 0
    %1004 = vmatprep.subr.bf16.mxu0 0
    %1005 = vmatpush2.bf16.msra.mxu0 0
    %1006 = vmatprep.mubr.bf16.mxu0 0
    %1007 = vmatmul.mubr.bf16.gmra.mxu0 %v972
    %v1008 = vpop.f32.mrf.mxu0
    %v1009 = vadd.f32 %v957, %v1008
    %v1010 = vpop.f32.mrf.mxu0
    %v1011 = vpop.f32.mrf.mxu0
    %v1012 = vadd.f32 %v957, %v1011
    %v1013 = vpop.f32.mrf.mxu0
    %1014 = vdwg.mxu0
    %v1015 = vmax.f32 %v1009, 0.0
    %v1016 = vmax.f32 %v1012, 0.0
    %v1017 = vpack.c.bf16 %v1016, %v1015
    %v1018 = vld [vmem:[%s13] sm:$0xf]
    %v1019 = vld [vmem:[%s13 + $0x4] sm:$0xf]
    %v1020 = vld [vmem:[%s13 + $0x8] sm:$0xf]
    %v1021 = vld [vmem:[%s13 + $0xc] sm:$0xf]
    %v1022 = vld [vmem:[%s13 + $0x10] sm:$0xf]
    %v1023 = vld [vmem:[%s13 + $0x14] sm:$0xf]
    %v1024 = vld [vmem:[%s13 + $0x18] sm:$0xf]
    %v1025 = vld [vmem:[%s13 + $0x1c] sm:$0xf]
    %v1026 = vld [vmem:[%s14] sm:$0x1]
    %v1028 = vlaneseq
    %v1029 = vshrl.u32 %v1028, 7
    %v1030 = vsub.s32 0, %v1029
    %v1031 = vrot.slane %v1026, %v1030
    %v1041 = vunpack.c.l.b16 %v1018
    %v1042 = vunpack.c.l.b16 %v1019
    %v1043 = vunpack.c.l.b16 %v1020
    %v1044 = vunpack.c.l.b16 %v1021
    %v1045 = vunpack.c.l.b16 %v1022
    %v1046 = vunpack.c.l.b16 %v1023
    %v1047 = vunpack.c.l.b16 %v1024
    %v1048 = vunpack.c.l.b16 %v1025
    %v1049 = vpack.c.b16 %v1042, %v1041
    %v1050 = vpack.c.b16 %v1044, %v1043
    %v1051 = vpack.c.b16 %v1046, %v1045
    %v1052 = vpack.c.b16 %v1048, %v1047
    %vm1057 = vcmask 523264
    %v1059 = vsel %vm1057, %v1017, 0
    %1061 = vmatprep.subr.bf16.mxu0 0
    %1062 = vmatpush1.bf16.msra.mxu0 0
    %1063 = vmatprep.subr.bf16.mxu0 0
    %1064 = vmatpush1.bf16.msra.mxu0 0
    %1065 = vmatprep.subr.bf16.mxu0 0
    %1066 = vmatpush1.bf16.msra.mxu0 0
    %1067 = vmatprep.subr.bf16.mxu0 0
    %1068 = vmatpush1.bf16.msra.mxu0 0
    %1069 = vmatprep.subr.bf16.mxu0 0
    %1070 = vmatpush1.bf16.msra.mxu0 %v1052
    %1071 = vmatprep.subr.bf16.mxu0 0
    %1072 = vmatpush1.bf16.msra.mxu0 %v1051
    %1073 = vmatprep.subr.bf16.mxu0 0
    %1074 = vmatpush1.bf16.msra.mxu0 %v1050
    %1075 = vmatprep.subr.bf16.mxu0 0
    %1076 = vmatpush1.bf16.msra.mxu0 %v1049
    %1077 = vmatprep.subr.bf16.mxu0 0
    %1078 = vmatpush2.bf16.msra.mxu0 0
    %1079 = vmatprep.subr.bf16.mxu0 0
    %1080 = vmatpush2.bf16.msra.mxu0 0
    %1081 = vmatprep.subr.bf16.mxu0 0
    %1082 = vmatpush2.bf16.msra.mxu0 0
    %1083 = vmatprep.subr.bf16.mxu0 0
    %1084 = vmatpush2.bf16.msra.mxu0 0
    %1085 = vmatprep.subr.bf16.mxu0 0
    %1086 = vmatpush2.bf16.msra.mxu0 0
    %1087 = vmatprep.subr.bf16.mxu0 0
    %1088 = vmatpush2.bf16.msra.mxu0 0
    %1089 = vmatprep.subr.bf16.mxu0 0
    %1090 = vmatpush2.bf16.msra.mxu0 0
    %1091 = vmatprep.subr.bf16.mxu0 0
    %1092 = vmatpush2.bf16.msra.mxu0 0
    %1093 = vmatprep.mubr.bf16.mxu0 0
    %1094 = vmatmul.mubr.bf16.gmra.mxu0 %v1059
    %v1095 = vpop.f32.mrf.mxu0
    %v1096 = vadd.f32 %v1031, %v1095
    %v1097 = vpop.f32.mrf.mxu0
    %v1098 = vpop.f32.mrf.mxu0
    %v1099 = vadd.f32 %v1031, %v1098
    %v1100 = vpop.f32.mrf.mxu0
    %1101 = vdwg.mxu0
    %v1102 = vadd.f32 %v1096, %v945
    %v1103 = vadd.f32 %v1099, %v946
    %v1104 = vsel %vm102, %v1102, 0.0
    %1105 = vadd.xlane.f32.xlu0 %v1104
    %v1106 = vpop.xlane.xlu0 %1105
    %v1107 = vsel %vm102, %v1103, 0.0
    %1108 = vadd.xlane.f32.xlu0 %v1107
    %v1109 = vpop.xlane.xlu0 %1108
    %v1110 = vmul.f32 %v1106, %v896
    %v1111 = vmul.f32 %v1109, %v896
    %v1112 = vsub.f32 %v1102, %v1110
    %v1113 = vsub.f32 %v1103, %v1111
    %v1114 = vmul.f32 %v1112, %v1112
    %v1115 = vmul.f32 %v1113, %v1113
    %v1116 = vsel %vm102, %v1114, 0.0
    %1117 = vadd.xlane.f32.xlu0 %v1116
    %v1118 = vpop.xlane.xlu0 %1117
    %v1119 = vsel %vm102, %v1115, 0.0
    %1120 = vadd.xlane.f32.xlu0 %v1119
    %v1121 = vpop.xlane.xlu0 %1120
    %v1122 = vmul.f32 %v1118, %v896
    %v1123 = vmul.f32 %v1121, %v896
    %v1124 = vadd.f32 %v1122, 1e-05
    %v1125 = vadd.f32 %v1123, 1e-05
    %v1126 = vrsqrt.pop %v1124
    %v1127 = vrsqrt.pop %v1125
    %v1128 = vmul.f32 %v1112, %v1126
    %v1129 = vmul.f32 %v1113, %v1127
    %v1130 = vld [vmem:[%s15] sm:$0x1]
    %v1132 = vlaneseq
    %v1133 = vshrl.u32 %v1132, 7
    %v1134 = vsub.s32 0, %v1133
    %v1135 = vrot.slane %v1130, %v1134
    %v1137 = vmul.f32 %v1128, %v1135
    %v1138 = vmul.f32 %v1129, %v1135
    %v1139 = vld [vmem:[%s16] sm:$0x1]
    %v1141 = vlaneseq
    %v1142 = vshrl.u32 %v1141, 7
    %v1143 = vsub.s32 0, %v1142
    %v1144 = vrot.slane %v1139, %v1143
    %v1146 = vadd.f32 %v1137, %v1144
    %v1147 = vadd.f32 %v1138, %v1144
    %v1148 = vmul.f32 %v1146, %v938
    %v1149 = vmul.f32 %v1147, %v943
    %1150 = vst.msk [vmem:[#allocation2] sm:$0xff] %vm102, %v1148
    %1151 = vst.msk [vmem:[#allocation2 + $0x8] sm:$0xff] %vm102, %v1149
    // Predicated region
    $region70: #{tpu_custom_call.1} parent=1 // pred_check
      _
    $region71: #{tpu_custom_call.1} parent=1 // pred_check_branch
      %1153 = sbr.rel (0) target = $region73
    $region72: #{tpu_custom_call.1} parent=1 // pred_region
      %s1155 = ssub.s32 256, 256
      %1156 = vsyncadd [#allocation3], %s1155
      %s1157 = sshll.u32 [#allocation2], 4
      %s1158 = int_to_ptr.vmem [resolvable:$true] %s1157
      %1163 = dma.vmem_to_hbm [thread:$0]  %s1158, 256, %s17, [#allocation3], 128, 128, 8
    $region73: #{tpu_custom_call.1} parent=1 // pred_fallthru
      _
    // Predicated region
    $region74: #{tpu_custom_call.1} parent=1 // pred_check
      _
    $region75: #{tpu_custom_call.1} parent=1 // pred_check_branch
      %1165 = sbr.rel (0) target = $region77
    $region76: #{tpu_custom_call.1} parent=1 // pred_region
      %s1167 = ssub.s32 512, 512
      %1168 = vsyncadd [#allocation5], %s1167
      %s1169 = sshll.u32 [#allocation4], 4
      %s1170 = int_to_ptr.vmem [resolvable:$true] %s1169
      %1175 = dma.vmem_to_hbm [thread:$0]  %s1170, 512, %s18, [#allocation5], 128, 128, 8
    $region77: #{tpu_custom_call.1} parent=1 // pred_fallthru
      _
    // Predicated region
    $region78: #{tpu_custom_call.1} parent=1 // pred_check
      _
    $region79: #{tpu_custom_call.1} parent=1 // pred_check_branch
      %1177 = sbr.rel (0) target = $region81
    $region80: #{tpu_custom_call.1} parent=1 // pred_region
      %1178 = dma.done [#allocation3], 256
    $region81: #{tpu_custom_call.1} parent=1 // pred_fallthru
      _
    // Predicated region
    $region82: #{tpu_custom_call.1} parent=1 // pred_check
      _
    $region83: #{tpu_custom_call.1} parent=1 // pred_check_branch
      %1180 = sbr.rel (0) target = $region85
    $region84: #{tpu_custom_call.1} parent=1 // pred_region
      %1181 = dma.done [#allocation5], 512
    $region85: #{tpu_custom_call.1} parent=1 // pred_fallthru
      _
    %1182 = vsyncpa [#allocation3], 1
    %1183 = vsyncpa [#allocation5], 1

</llo_original>
